<compile_context>
chip_gen: v6e
topology: v6e:2x2x1
jax: 0.10.0
libtpu: 0.0.40
codegen_flags: <defaults>
</compile_context>

<pallas_src>
import functools
import math

import jax
import jax.numpy as jnp
from jax.experimental import pallas as pl
from jax.experimental.pallas import tpu as pltpu

EPS = 1e-6                     # LayerNorm epsilon
NEG_INF = -1e30                # finite mask fill: keeps fully-masked rows NaN-free
VMEM_LIMIT = 32 * 1024 * 1024  # <= scoped defaults on v6e/v7x, raises v5e's 16 MiB default


def _pick_tile(n, cap=256):
    """Largest multiple of 8 that divides n and is <= cap; falls back to n (full dim)."""
    best = n
    t = 8
    while t <= min(cap, n):
        if n % t == 0:
            best = t
        t += 8
    return best


# ----------------- kernel 1: fused LayerNorm + uniform multi-head attention -----------------

def _ln_attn_kernel(x_q_ref, x_k_ref, mem_ref, mask_ref, g_ref, b_ref,
                    wq_ref, wkv_ref, wc_ref,
                    o_ref, q_out_ref,
                    pq_sc, m_sc, l_sc, acc_sc,
                    *, h, d_head):
    """grid = (B, NQ, NL, NK); (NL, NK) stream the flattened (n_layer+1)*len_key kv positions.

    The last layer (li == NL-1) is the freshly layernormed input (the FC-Transformer "glue"
    layer) and is recomputed here from x instead of being materialized/flattened in HBM.
    Online (flash-style) softmax keeps per-head running max / denom in VMEM scratch.
    """
    li = pl.program_id(2)
    ki = pl.program_id(3)
    n_l = pl.num_programs(2)
    n_k = pl.num_programs(3)
    d_model = acc_sc.shape[-1]
    scale = d_head ** (-0.5)

    gamma = g_ref[...]
    beta = b_ref[...]

    def layer_norm(v):
        mu = jnp.mean(v, axis=-1, keepdims=True)
        var = jnp.mean((v - mu) ** 2, axis=-1, keepdims=True)
        return (v - mu) * jax.lax.rsqrt(var + EPS) * gamma + beta

    @pl.when((li == 0) & (ki == 0))
    def _init():
        qn = layer_norm(x_q_ref[...])                                         # (tq, D)
        pq_sc[...] = jnp.dot(qn, wq_ref[...],
                             preferred_element_type=jnp.float32) * scale
        m_sc[...] = jnp.full_like(m_sc, NEG_INF)
        l_sc[...] = jnp.zeros_like(l_sc)
        acc_sc[...] = jnp.zeros_like(acc_sc)

    # Key/value block: memory-bank layer (native layout) or LN(x) for the glue layer.
    # K and V projections fused into a single wide (D, 2D) MXU matmul.
    kv_raw = jnp.where(li == n_l - 1, layer_norm(x_k_ref[...]), mem_ref[...])  # (tk, D)
    pkv = jnp.dot(kv_raw, wkv_ref[...], preferred_element_type=jnp.float32)    # (tk, 2D)
    maskb = mask_ref[...]                                                      # (tq, tk)

    for hi in range(h):
        sl = slice(hi * d_head, (hi + 1) * d_head)
        qh = pq_sc[:, sl]                                                      # (tq, dh), pre-scaled
        kh = pkv[:, sl]                                                        # (tk, dh)
        vh = pkv[:, d_model + hi * d_head: d_model + (hi + 1) * d_head]        # (tk, dh)
        s = jax.lax.dot_general(qh, kh, (((1,), (1,)), ((), ())),
                                preferred_element_type=jnp.float32)            # (tq, tk)
        s = jnp.where(maskb > 0.5, NEG_INF, s)
        m_old = m_sc[:, hi:hi + 1]
        m_new = jnp.maximum(m_old, jnp.max(s, axis=-1, keepdims=True))
        alpha = jnp.exp(m_old - m_new)
        p = jnp.exp(s - m_new)
        l_sc[:, hi:hi + 1] = alpha * l_sc[:, hi:hi + 1] + jnp.sum(p, axis=-1, keepdims=True)
        acc_sc[:, sl] = alpha * acc_sc[:, sl] + jnp.dot(p, vh, preferred_element_type=jnp.float32)
        m_sc[:, hi:hi + 1] = m_new

    @pl.when((li == n_l - 1) & (ki == n_k - 1))
    def _finalize():
        # Layernormed query is also the new memory-bank layer (write-once output).
        q_out_ref[...] = layer_norm(x_q_ref[...]).astype(q_out_ref.dtype)
        inv_l = pl.reciprocal(l_sc[...], approx=True)          # EUP slot, frees the VPU
        for hi in range(h):
            sl = slice(hi * d_head, (hi + 1) * d_head)
            acc_sc[:, sl] = acc_sc[:, sl] * inv_l[:, hi:hi + 1]
        o_ref[...] = jnp.dot(acc_sc[...], wc_ref[...],
                             preferred_element_type=jnp.float32).astype(o_ref.dtype)


# ---------------- kernel 2: residual + LayerNorm + FeedForward + residual -------------------

def _resid_ffn_kernel(a_ref, x_ref, g_ref, b_ref, w1_ref, b1_ref, w2_ref, b2_ref, o_ref):
    """Row-tiled: residual add -> LayerNorm -> Linear/ReLU/Linear -> residual add."""
    x1 = a_ref[...] + x_ref[...]                 # postprocess_attn ('da', dropout=id)
    mu = jnp.mean(x1, axis=-1, keepdims=True)
    var = jnp.mean((x1 - mu) ** 2, axis=-1, keepdims=True)
    y = (x1 - mu) * jax.lax.rsqrt(var + EPS) * g_ref[...] + b_ref[...]
    hdn = jnp.maximum(
        jnp.dot(y, w1_ref[...], preferred_element_type=jnp.float32) + b1_ref[...], 0.0)
    ff = jnp.dot(hdn, w2_ref[...], preferred_element_type=jnp.float32) + b2_ref[...]
    o_ref[...] = (ff + x1).astype(o_ref.dtype)   # postprocess_ffn ('da', dropout=id)


# -------------------------------------- wrapper ---------------------------------------------

def fct_encoder_layer(params, x, memory_bank, attn_mask,
                      *, q_tile=None, k_tile=None, row_tile=None):
    """Pallas implementation of FCTEncoderLayer.forward (eval mode, pad_mask=None).

    x:           (B, L, D) float32
    memory_bank: (n_layer, B, L, D) float32 or None
    attn_mask:   (B, L, L) bool  (True = masked / -inf)
    returns (out (B, L, D), new_memory_bank (n_layer+1, B, L, D))
    """
    B, L, D = x.shape
    H = params["h"]
    dh = D // H

    if memory_bank is None:
        mem_in = jnp.zeros((1, B, L, D), x.dtype)   # dummy block source; glue layer only
        n_mem = 0
    else:
        mem_in = memory_bank
        n_mem = memory_bank.shape[0]
    n_mem_blocks = mem_in.shape[0]
    n_layers = n_mem + 1                            # + layernormed input ("glue" layer)

    tq = q_tile or _pick_tile(L)
    tk = k_tile or _pick_tile(L)
    nq = L // tq
    nk = L // tk

    # Fused K/V projection weight; mask kept at (B, L, L) — no layer broadcast materialized.
    wkv = jnp.concatenate([params["wk"], params["wv"]], axis=1)     # (D, 2D)
    mask_f = attn_mask.astype(jnp.float32)

    attn_out, q_ln = pl.pallas_call(
        functools.partial(_ln_attn_kernel, h=H, d_head=dh),
        out_shape=(jax.ShapeDtypeStruct((B, L, D), jnp.float32),
                   jax.ShapeDtypeStruct((B, L, D), jnp.float32)),
        grid=(B, nq, n_layers, nk),
        in_specs=[
            pl.BlockSpec((None, tq, D), lambda b, qi, li, ki: (b, qi, 0)),     # x (query rows)
            pl.BlockSpec((None, tk, D), lambda b, qi, li, ki: (b, ki, 0)),     # x (key rows, glue)
            pl.BlockSpec((None, None, tk, D),                                  # memory bank, native layout
                         lambda b, qi, li, ki: (jnp.minimum(li, n_mem_blocks - 1), b, ki, 0)),
            pl.BlockSpec((None, tq, tk), lambda b, qi, li, ki: (b, qi, ki)),   # mask tile (layer-invariant)
            pl.BlockSpec((1, D), lambda b, qi, li, ki: (0, 0)),                # ln1 gamma
            pl.BlockSpec((1, D), lambda b, qi, li, ki: (0, 0)),                # ln1 beta
            pl.BlockSpec((D, D), lambda b, qi, li, ki: (0, 0)),                # wq
            pl.BlockSpec((D, 2 * D), lambda b, qi, li, ki: (0, 0)),            # [wk | wv]
            pl.BlockSpec((D, D), lambda b, qi, li, ki: (0, 0)),                # wc
        ],
        out_specs=(pl.BlockSpec((None, tq, D), lambda b, qi, li, ki: (b, qi, 0)),
                   pl.BlockSpec((None, tq, D), lambda b, qi, li, ki: (b, qi, 0))),
        scratch_shapes=[pltpu.VMEM((tq, D), jnp.float32),   # projected, scaled query
                        pltpu.VMEM((tq, H), jnp.float32),   # running max (per head)
                        pltpu.VMEM((tq, H), jnp.float32),   # running denom (per head)
                        pltpu.VMEM((tq, D), jnp.float32)],  # unnormalized per-head context
        compiler_params=pltpu.CompilerParams(
            dimension_semantics=("parallel", "parallel", "arbitrary", "arbitrary"),
            vmem_limit_bytes=VMEM_LIMIT),
    )(x, x, mem_in, mask_f,
      params["ln1_g"].reshape(1, D), params["ln1_b"].reshape(1, D),
      params["wq"], wkv, params["wc"])

    new_mem = q_ln[None] if memory_bank is None else jnp.concatenate(
        [memory_bank, q_ln[None]], axis=0)

    rows = B * L
    Dff = params["w1"].shape[1]
    tr = row_tile or _pick_tile(rows)
    nr = rows // tr

    out2d = pl.pallas_call(
        _resid_ffn_kernel,
        out_shape=jax.ShapeDtypeStruct((rows, D), jnp.float32),
        grid=(nr,),
        in_specs=[
            pl.BlockSpec((tr, D), lambda r: (r, 0)),
            pl.BlockSpec((tr, D), lambda r: (r, 0)),
            pl.BlockSpec((1, D), lambda r: (0, 0)),
            pl.BlockSpec((1, D), lambda r: (0, 0)),
            pl.BlockSpec((D, Dff), lambda r: (0, 0)),
            pl.BlockSpec((1, Dff), lambda r: (0, 0)),
            pl.BlockSpec((Dff, D), lambda r: (0, 0)),
            pl.BlockSpec((1, D), lambda r: (0, 0)),
        ],
        out_specs=pl.BlockSpec((tr, D), lambda r: (r, 0)),
        compiler_params=pltpu.CompilerParams(
            dimension_semantics=("parallel",),
            vmem_limit_bytes=VMEM_LIMIT),
    )(attn_out.reshape(rows, D), x.reshape(rows, D),
      params["ln2_g"].reshape(1, D), params["ln2_b"].reshape(1, D),
      params["w1"], params["b1"].reshape(1, Dff),
      params["w2"], params["b2"].reshape(1, D))

    return out2d.reshape(B, L, D), new_mem


# ------------------------------ pure-JAX reference (check) ----------------------------------

def reference(params, x, memory_bank, attn_mask):
    B, Lq, D = x.shape
    H = params["h"]
    dh = D // H

    def ln(v, g, b):
        mu = v.mean(-1, keepdims=True)
        var = ((v - mu) ** 2).mean(-1, keepdims=True)
        return (v - mu) * jax.lax.rsqrt(var + EPS) * g + b

    q = ln(x, params["ln1_g"], params["ln1_b"])
    mem = q[None] if memory_bank is None else jnp.concatenate([memory_bank, q[None]], 0)
    nL, _, Lk, _ = mem.shape
    kv = jnp.transpose(mem, (1, 0, 2, 3)).reshape(B, nL * Lk, D)

    pq = (q @ params["wq"]).reshape(B, Lq, H, dh).transpose(0, 2, 1, 3) * dh ** (-0.5)
    pk = (kv @ params["wk"]).reshape(B, nL * Lk, H, dh).transpose(0, 2, 1, 3)
    pv = (kv @ params["wv"]).reshape(B, nL * Lk, H, dh).transpose(0, 2, 1, 3)

    s = jnp.einsum("bhqd,bhkd->bhqk", pq, pk)
    m = jnp.broadcast_to(attn_mask[:, None, :, None, :],
                         (B, 1, Lq, nL, Lk)).reshape(B, 1, Lq, nL * Lk)
    s = jnp.where(m, -jnp.inf, s)
    p = jax.nn.softmax(s, axis=-1)
    o = jnp.einsum("bhqk,bhkd->bhqd", p, pv).transpose(0, 2, 1, 3).reshape(B, Lq, D)
    o = o @ params["wc"]

    x1 = o + x
    y = ln(x1, params["ln2_g"], params["ln2_b"])
    ff = jnp.maximum(y @ params["w1"] + params["b1"], 0.0) @ params["w2"] + params["b2"]
    return ff + x1, mem


# ------------------------------------------ main --------------------------------------------

if __name__ == "__main__":
    # Small, module-consistent shapes.
    B, L, D, H, Dff, N_LAYER = 2, 8, 32, 4, 64, 2

    key = jax.random.PRNGKey(0)
    ks = jax.random.split(key, 12)

    def xavier(k, shape):
        fan_in, fan_out = shape
        return jax.random.normal(k, shape, jnp.float32) * math.sqrt(2.0 / (fan_in + fan_out))

    params = {
        "h": H,
        "ln1_g": 1.0 + 0.1 * jax.random.normal(ks[0], (D,), jnp.float32),
        "ln1_b": 0.1 * jax.random.normal(ks[1], (D,), jnp.float32),
        "wq": xavier(ks[2], (D, D)),
        "wk": xavier(ks[3], (D, D)),
        "wv": xavier(ks[4], (D, D)),
        "wc": xavier(ks[5], (D, D)),
        "ln2_g": 1.0 + 0.1 * jax.random.normal(ks[6], (D,), jnp.float32),
        "ln2_b": 0.1 * jax.random.normal(ks[7], (D,), jnp.float32),
        "w1": xavier(ks[8], (D, Dff)),
        "b1": 0.1 * jax.random.normal(ks[9], (Dff,), jnp.float32),
        "w2": xavier(ks[10], (Dff, D)),
        "b2": 0.1 * jax.random.normal(ks[11], (D,), jnp.float32),
    }

    dk = jax.random.split(jax.random.PRNGKey(1), 2)
    x = jax.random.normal(dk[0], (B, L, D), jnp.float32)
    memory_bank = jax.random.normal(dk[1], (N_LAYER, B, L, D), jnp.float32)

    # Padding-style attention mask: mask the last 2 key positions of batch 1.
    attn_mask = jnp.zeros((B, L, L), dtype=bool).at[1, :, -2:].set(True)

    # row_tile=8 exercises the row-tiled FFN grid (2 blocks) at these tiny shapes.
    out, new_mem = fct_encoder_layer(params, x, memory_bank, attn_mask, row_tile=8)
    out = jax.block_until_ready(out)
    new_mem = jax.block_until_ready(new_mem)

    ref_out, ref_mem = reference(params, x, memory_bank, attn_mask)
    assert out.shape == (B, L, D) and new_mem.shape == (N_LAYER + 1, B, L, D)
    # Looser tolerance on `out`: the EUP approximate reciprocal in the softmax normalizer
    # (pl.reciprocal(approx=True)) introduces a small (<<1e-2) relative error vs. exact divide.
    assert jnp.allclose(out, ref_out, atol=2e-2, rtol=2e-2), "mismatch vs reference"
    assert jnp.allclose(new_mem, ref_mem, atol=1e-5, rtol=1e-5), "memory bank mismatch"

    print("KERNEL_OK")
</pallas_src>

<mosaic_0001>
module attributes {stable_mosaic.version = 11 : i64} {
  func.func @_ln_attn_kernel(%arg0: i32, %arg1: i32, %arg2: i32, %arg3: i32, %arg4: memref<1x8x32xf32, #tpu.memory_space<vmem>>, %arg5: memref<1x8x32xf32, #tpu.memory_space<vmem>>, %arg6: memref<1x1x8x32xf32, #tpu.memory_space<vmem>>, %arg7: memref<1x8x8xf32, #tpu.memory_space<vmem>>, %arg8: memref<1x32xf32, #tpu.memory_space<vmem>>, %arg9: memref<1x32xf32, #tpu.memory_space<vmem>>, %arg10: memref<32x32xf32, #tpu.memory_space<vmem>>, %arg11: memref<32x64xf32, #tpu.memory_space<vmem>>, %arg12: memref<32x32xf32, #tpu.memory_space<vmem>>, %arg13: memref<1x8x32xf32, #tpu.memory_space<vmem>>, %arg14: memref<1x8x32xf32, #tpu.memory_space<vmem>>, %arg15: memref<8x32xf32, #tpu.memory_space<vmem>>, %arg16: memref<8x4xf32, #tpu.memory_space<vmem>>, %arg17: memref<8x4xf32, #tpu.memory_space<vmem>>, %arg18: memref<8x32xf32, #tpu.memory_space<vmem>>) attributes {dimension_semantics = [#tpu.dimension_semantics<parallel>, #tpu.dimension_semantics<parallel>, #tpu.dimension_semantics<arbitrary>, #tpu.dimension_semantics<arbitrary>], iteration_bounds = array<i64: 2, 1, 3, 1>, scalar_prefetch = 0 : i64, scratch_operands = 4 : i64, tpu.core_type = #tpu.core_type<tc>, window_params = [{transform_indices = @transform_0, window_bounds = array<i64: 1, 8, 32>}, {transform_indices = @transform_1, window_bounds = array<i64: 1, 8, 32>}, {transform_indices = @transform_2, window_bounds = array<i64: 1, 1, 8, 32>}, {transform_indices = @transform_3, window_bounds = array<i64: 1, 8, 8>}, {pipeline_mode = #tpu.pipeline_mode<synchronous>, transform_indices = @transform_4, window_bounds = array<i64: 1, 32>}, {pipeline_mode = #tpu.pipeline_mode<synchronous>, transform_indices = @transform_5, window_bounds = array<i64: 1, 32>}, {pipeline_mode = #tpu.pipeline_mode<synchronous>, transform_indices = @transform_6, window_bounds = array<i64: 32, 32>}, {pipeline_mode = #tpu.pipeline_mode<synchronous>, transform_indices = @transform_7, window_bounds = array<i64: 32, 64>}, {pipeline_mode = #tpu.pipeline_mode<synchronous>, transform_indices = @transform_8, window_bounds = array<i64: 32, 32>}, {transform_indices = @transform_9, window_bounds = array<i64: 1, 8, 32>}, {transform_indices = @transform_10, window_bounds = array<i64: 1, 8, 32>}]} {
    %c0 = arith.constant 0 : index
    %c0_0 = arith.constant 0 : index
    %0 = vector.load %arg8[%c0, %c0_0] : memref<1x32xf32, #tpu.memory_space<vmem>>, vector<1x32xf32>
    %c0_1 = arith.constant 0 : index
    %c0_2 = arith.constant 0 : index
    %1 = vector.load %arg9[%c0_1, %c0_2] : memref<1x32xf32, #tpu.memory_space<vmem>>, vector<1x32xf32>
    %c0_i32 = arith.constant 0 : i32
    %2 = arith.cmpi eq, %arg2, %c0_i32 : i32
    %c0_i32_3 = arith.constant 0 : i32
    %3 = arith.cmpi eq, %arg3, %c0_i32_3 : i32
    %4 = arith.andi %2, %3 : i1
    %5 = arith.extui %4 : i1 to i32
    %c0_i32_4 = arith.constant 0 : i32
    %6 = arith.cmpi ne, %5, %c0_i32_4 : i32
    scf.if %6 {
      %c0_99 = arith.constant 0 : index
      %c0_100 = arith.constant 0 : index
      %c0_101 = arith.constant 0 : index
      %164 = vector.load %arg4[%c0_99, %c0_100, %c0_101] : memref<1x8x32xf32, #tpu.memory_space<vmem>>, vector<1x8x32xf32>
      %165 = vector.shape_cast %164 : vector<1x8x32xf32> to vector<8x32xf32>
      %cst_102 = arith.constant dense<0.000000e+00> : vector<8xf32>
      %166 = vector.multi_reduction <add>, %165, %cst_102 [1] : vector<8x32xf32> to vector<8xf32>
      %167 = vector.shape_cast %166 : vector<8xf32> to vector<8x1xf32>
      %cst_103 = arith.constant 3.200000e+01 : f32
      %168 = vector.broadcast %cst_103 : f32 to vector<8x1xf32>
      %169 = arith.divf %167, %168 : vector<8x1xf32>
      %170 = vector.broadcast %169 : vector<8x1xf32> to vector<8x32xf32>
      %171 = arith.subf %165, %170 : vector<8x32xf32>
      %172 = arith.mulf %171, %171 : vector<8x32xf32>
      %cst_104 = arith.constant dense<0.000000e+00> : vector<8xf32>
      %173 = vector.multi_reduction <add>, %172, %cst_104 [1] : vector<8x32xf32> to vector<8xf32>
      %174 = vector.shape_cast %173 : vector<8xf32> to vector<8x1xf32>
      %cst_105 = arith.constant 3.200000e+01 : f32
      %175 = vector.broadcast %cst_105 : f32 to vector<8x1xf32>
      %176 = arith.divf %174, %175 : vector<8x1xf32>
      %177 = vector.broadcast %169 : vector<8x1xf32> to vector<8x32xf32>
      %178 = arith.subf %165, %177 : vector<8x32xf32>
      %cst_106 = arith.constant 9.99999997E-7 : f32
      %179 = vector.broadcast %cst_106 : f32 to vector<8x1xf32>
      %180 = arith.addf %176, %179 : vector<8x1xf32>
      %181 = math.rsqrt %180 : vector<8x1xf32>
      %182 = vector.broadcast %181 : vector<8x1xf32> to vector<8x32xf32>
      %183 = arith.mulf %178, %182 : vector<8x32xf32>
      %184 = vector.broadcast %0 : vector<1x32xf32> to vector<8x32xf32>
      %185 = arith.mulf %183, %184 : vector<8x32xf32>
      %186 = vector.broadcast %1 : vector<1x32xf32> to vector<8x32xf32>
      %187 = arith.addf %185, %186 : vector<8x32xf32>
      %c0_107 = arith.constant 0 : index
      %c0_108 = arith.constant 0 : index
      %188 = vector.load %arg10[%c0_107, %c0_108] : memref<32x32xf32, #tpu.memory_space<vmem>>, vector<32x32xf32>
      %cst_109 = arith.constant dense<0.000000e+00> : vector<8x32xf32>
      %189 = tpu.matmul %187, %188, %cst_109 {dimension_numbers = #tpu.dot_dimension_numbers<[1], [0], [0], [1], [0, 0, 1, 1], [], []>} : vector<8x32xf32>, vector<32x32xf32>, vector<8x32xf32> -> vector<8x32xf32>
      %cst_110 = arith.constant 0.353553385 : f32
      %190 = vector.broadcast %cst_110 : f32 to vector<8x32xf32>
      %191 = arith.mulf %189, %190 : vector<8x32xf32>
      %c0_111 = arith.constant 0 : index
      %c0_112 = arith.constant 0 : index
      %192 = vector.load %arg15[%c0_111, %c0_112] : memref<8x32xf32, #tpu.memory_space<vmem>>, vector<8x32xf32>
      tpu.vector_store %arg15[%c0_111, %c0_112], %191 {strides = array<i32>} : memref<8x32xf32, #tpu.memory_space<vmem>>, vector<8x32xf32>,
      %cst_113 = arith.constant -1.000000e+30 : f32
      %193 = vector.broadcast %cst_113 : f32 to vector<8x4xf32>
      %c0_114 = arith.constant 0 : index
      %c0_115 = arith.constant 0 : index
      %194 = vector.load %arg16[%c0_114, %c0_115] : memref<8x4xf32, #tpu.memory_space<vmem>>, vector<8x4xf32>
      tpu.vector_store %arg16[%c0_114, %c0_115], %193 {strides = array<i32>} : memref<8x4xf32, #tpu.memory_space<vmem>>, vector<8x4xf32>,
      %cst_116 = arith.constant 0.000000e+00 : f32
      %195 = vector.broadcast %cst_116 : f32 to vector<8x4xf32>
      %c0_117 = arith.constant 0 : index
      %c0_118 = arith.constant 0 : index
      %196 = vector.load %arg17[%c0_117, %c0_118] : memref<8x4xf32, #tpu.memory_space<vmem>>, vector<8x4xf32>
      tpu.vector_store %arg17[%c0_117, %c0_118], %195 {strides = array<i32>} : memref<8x4xf32, #tpu.memory_space<vmem>>, vector<8x4xf32>,
      %cst_119 = arith.constant 0.000000e+00 : f32
      %197 = vector.broadcast %cst_119 : f32 to vector<8x32xf32>
      %c0_120 = arith.constant 0 : index
      %c0_121 = arith.constant 0 : index
      %198 = vector.load %arg18[%c0_120, %c0_121] : memref<8x32xf32, #tpu.memory_space<vmem>>, vector<8x32xf32>
      tpu.vector_store %arg18[%c0_120, %c0_121], %197 {strides = array<i32>} : memref<8x32xf32, #tpu.memory_space<vmem>>, vector<8x32xf32>,
    } else {
    }
    %c2_i32 = arith.constant 2 : i32
    %7 = arith.cmpi eq, %arg2, %c2_i32 : i32
    %c0_5 = arith.constant 0 : index
    %c0_6 = arith.constant 0 : index
    %c0_7 = arith.constant 0 : index
    %8 = vector.load %arg5[%c0_5, %c0_6, %c0_7] : memref<1x8x32xf32, #tpu.memory_space<vmem>>, vector<1x8x32xf32>
    %9 = vector.shape_cast %8 : vector<1x8x32xf32> to vector<8x32xf32>
    %cst = arith.constant dense<0.000000e+00> : vector<8xf32>
    %10 = vector.multi_reduction <add>, %9, %cst [1] : vector<8x32xf32> to vector<8xf32>
    %11 = vector.shape_cast %10 : vector<8xf32> to vector<8x1xf32>
    %cst_8 = arith.constant 3.200000e+01 : f32
    %12 = vector.broadcast %cst_8 : f32 to vector<8x1xf32>
    %13 = arith.divf %11, %12 : vector<8x1xf32>
    %14 = vector.broadcast %13 : vector<8x1xf32> to vector<8x32xf32>
    %15 = arith.subf %9, %14 : vector<8x32xf32>
    %16 = arith.mulf %15, %15 : vector<8x32xf32>
    %cst_9 = arith.constant dense<0.000000e+00> : vector<8xf32>
    %17 = vector.multi_reduction <add>, %16, %cst_9 [1] : vector<8x32xf32> to vector<8xf32>
    %18 = vector.shape_cast %17 : vector<8xf32> to vector<8x1xf32>
    %cst_10 = arith.constant 3.200000e+01 : f32
    %19 = vector.broadcast %cst_10 : f32 to vector<8x1xf32>
    %20 = arith.divf %18, %19 : vector<8x1xf32>
    %21 = vector.broadcast %13 : vector<8x1xf32> to vector<8x32xf32>
    %22 = arith.subf %9, %21 : vector<8x32xf32>
    %cst_11 = arith.constant 9.99999997E-7 : f32
    %23 = vector.broadcast %cst_11 : f32 to vector<8x1xf32>
    %24 = arith.addf %20, %23 : vector<8x1xf32>
    %25 = math.rsqrt %24 : vector<8x1xf32>
    %26 = vector.broadcast %25 : vector<8x1xf32> to vector<8x32xf32>
    %27 = arith.mulf %22, %26 : vector<8x32xf32>
    %28 = vector.broadcast %0 : vector<1x32xf32> to vector<8x32xf32>
    %29 = arith.mulf %27, %28 : vector<8x32xf32>
    %30 = vector.broadcast %1 : vector<1x32xf32> to vector<8x32xf32>
    %31 = arith.addf %29, %30 : vector<8x32xf32>
    %c0_12 = arith.constant 0 : index
    %c0_13 = arith.constant 0 : index
    %c0_14 = arith.constant 0 : index
    %c0_15 = arith.constant 0 : index
    %32 = vector.load %arg6[%c0_12, %c0_13, %c0_14, %c0_15] : memref<1x1x8x32xf32, #tpu.memory_space<vmem>>, vector<1x1x8x32xf32>
    %33 = vector.shape_cast %32 : vector<1x1x8x32xf32> to vector<8x32xf32>
    %34 = arith.select %7, %31, %33 : vector<8x32xf32>
    %c0_16 = arith.constant 0 : index
    %c0_17 = arith.constant 0 : index
    %35 = vector.load %arg11[%c0_16, %c0_17] : memref<32x64xf32, #tpu.memory_space<vmem>>, vector<32x64xf32>
    %cst_18 = arith.constant dense<0.000000e+00> : vector<8x64xf32>
    %36 = tpu.matmul %34, %35, %cst_18 {dimension_numbers = #tpu.dot_dimension_numbers<[1], [0], [0], [1], [0, 0, 1, 1], [], []>} : vector<8x32xf32>, vector<32x64xf32>, vector<8x64xf32> -> vector<8x64xf32>
    %c0_19 = arith.constant 0 : index
    %c0_20 = arith.constant 0 : index
    %c0_21 = arith.constant 0 : index
    %37 = vector.load %arg7[%c0_19, %c0_20, %c0_21] : memref<1x8x8xf32, #tpu.memory_space<vmem>>, vector<1x8x8xf32>
    %38 = vector.shape_cast %37 : vector<1x8x8xf32> to vector<8x8xf32>
    %c0_22 = arith.constant 0 : index
    %c0_23 = arith.constant 0 : index
    %39 = vector.load %arg15[%c0_22, %c0_23] : memref<8x32xf32, #tpu.memory_space<vmem>>, vector<8x8xf32>
    %40 = vector.extract_strided_slice %36 {offsets = [0, 0], sizes = [8, 8], strides = [1, 1]} : vector<8x64xf32> to vector<8x8xf32>
    %41 = vector.extract_strided_slice %36 {offsets = [0, 32], sizes = [8, 8], strides = [1, 1]} : vector<8x64xf32> to vector<8x8xf32>
    %cst_24 = arith.constant dense<0.000000e+00> : vector<8x8xf32>
    %42 = tpu.matmul %39, %40, %cst_24 {dimension_numbers = #tpu.dot_dimension_numbers<[1], [1], [0], [0], [0, 0, 1, 0], [], []>} : vector<8x8xf32>, vector<8x8xf32>, vector<8x8xf32> -> vector<8x8xf32>
    %cst_25 = arith.constant 5.000000e-01 : f32
    %43 = vector.broadcast %cst_25 : f32 to vector<8x8xf32>
    %44 = arith.cmpf ogt, %38, %43 : vector<8x8xf32>
    %cst_26 = arith.constant -1.000000e+30 : f32
    %45 = vector.broadcast %cst_26 : f32 to vector<8x8xf32>
    %46 = arith.select %44, %45, %42 : vector<8x8xi1>, vector<8x8xf32>
    %c0_27 = arith.constant 0 : index
    %c0_28 = arith.constant 0 : index
    %47 = vector.load %arg16[%c0_27, %c0_28] : memref<8x4xf32, #tpu.memory_space<vmem>>, vector<8x1xf32>
    %cst_29 = arith.constant dense<0xFF800000> : vector<8xf32>
    %48 = vector.multi_reduction <maximumf>, %46, %cst_29 [1] : vector<8x8xf32> to vector<8xf32>
    %49 = vector.shape_cast %48 : vector<8xf32> to vector<8x1xf32>
    %50 = arith.maximumf %47, %49 : vector<8x1xf32>
    %51 = arith.subf %47, %50 : vector<8x1xf32>
    %52 = math.exp %51 : vector<8x1xf32>
    %53 = vector.broadcast %50 : vector<8x1xf32> to vector<8x8xf32>
    %54 = arith.subf %46, %53 : vector<8x8xf32>
    %55 = math.exp %54 : vector<8x8xf32>
    %c0_30 = arith.constant 0 : index
    %c0_31 = arith.constant 0 : index
    %56 = vector.load %arg17[%c0_30, %c0_31] : memref<8x4xf32, #tpu.memory_space<vmem>>, vector<8x1xf32>
    %57 = arith.mulf %52, %56 : vector<8x1xf32>
    %cst_32 = arith.constant dense<0.000000e+00> : vector<8xf32>
    %58 = vector.multi_reduction <add>, %55, %cst_32 [1] : vector<8x8xf32> to vector<8xf32>
    %59 = vector.shape_cast %58 : vector<8xf32> to vector<8x1xf32>
    %60 = arith.addf %57, %59 : vector<8x1xf32>
    %c0_33 = arith.constant 0 : index
    %c0_34 = arith.constant 0 : index
    %61 = vector.load %arg17[%c0_33, %c0_34] : memref<8x4xf32, #tpu.memory_space<vmem>>, vector<8x1xf32>
    tpu.vector_store %arg17[%c0_33, %c0_34], %60 {strides = array<i32>} : memref<8x4xf32, #tpu.memory_space<vmem>>, vector<8x1xf32>,
    %c0_35 = arith.constant 0 : index
    %c0_36 = arith.constant 0 : index
    %62 = vector.load %arg18[%c0_35, %c0_36] : memref<8x32xf32, #tpu.memory_space<vmem>>, vector<8x8xf32>
    %63 = vector.broadcast %52 : vector<8x1xf32> to vector<8x8xf32>
    %64 = arith.mulf %63, %62 : vector<8x8xf32>
    %cst_37 = arith.constant dense<0.000000e+00> : vector<8x8xf32>
    %65 = tpu.matmul %55, %41, %cst_37 {dimension_numbers = #tpu.dot_dimension_numbers<[1], [0], [0], [1], [0, 0, 1, 1], [], []>} : vector<8x8xf32>, vector<8x8xf32>, vector<8x8xf32> -> vector<8x8xf32>
    %66 = arith.addf %64, %65 : vector<8x8xf32>
    %c0_38 = arith.constant 0 : index
    %c0_39 = arith.constant 0 : index
    %67 = vector.load %arg18[%c0_38, %c0_39] : memref<8x32xf32, #tpu.memory_space<vmem>>, vector<8x8xf32>
    tpu.vector_store %arg18[%c0_38, %c0_39], %66 {strides = array<i32>} : memref<8x32xf32, #tpu.memory_space<vmem>>, vector<8x8xf32>,
    %c0_40 = arith.constant 0 : index
    %c0_41 = arith.constant 0 : index
    %68 = vector.load %arg16[%c0_40, %c0_41] : memref<8x4xf32, #tpu.memory_space<vmem>>, vector<8x1xf32>
    tpu.vector_store %arg16[%c0_40, %c0_41], %50 {strides = array<i32>} : memref<8x4xf32, #tpu.memory_space<vmem>>, vector<8x1xf32>,
    %c0_42 = arith.constant 0 : index
    %c8 = arith.constant 8 : index
    %69 = vector.load %arg15[%c0_42, %c8] : memref<8x32xf32, #tpu.memory_space<vmem>>, vector<8x8xf32>
    %70 = vector.extract_strided_slice %36 {offsets = [0, 8], sizes = [8, 8], strides = [1, 1]} : vector<8x64xf32> to vector<8x8xf32>
    %71 = vector.extract_strided_slice %36 {offsets = [0, 40], sizes = [8, 8], strides = [1, 1]} : vector<8x64xf32> to vector<8x8xf32>
    %cst_43 = arith.constant dense<0.000000e+00> : vector<8x8xf32>
    %72 = tpu.matmul %69, %70, %cst_43 {dimension_numbers = #tpu.dot_dimension_numbers<[1], [1], [0], [0], [0, 0, 1, 0], [], []>} : vector<8x8xf32>, vector<8x8xf32>, vector<8x8xf32> -> vector<8x8xf32>
    %cst_44 = arith.constant 5.000000e-01 : f32
    %73 = vector.broadcast %cst_44 : f32 to vector<8x8xf32>
    %74 = arith.cmpf ogt, %38, %73 : vector<8x8xf32>
    %cst_45 = arith.constant -1.000000e+30 : f32
    %75 = vector.broadcast %cst_45 : f32 to vector<8x8xf32>
    %76 = arith.select %74, %75, %72 : vector<8x8xi1>, vector<8x8xf32>
    %c0_46 = arith.constant 0 : index
    %c1 = arith.constant 1 : index
    %77 = vector.load %arg16[%c0_46, %c1] : memref<8x4xf32, #tpu.memory_space<vmem>>, vector<8x1xf32>
    %cst_47 = arith.constant dense<0xFF800000> : vector<8xf32>
    %78 = vector.multi_reduction <maximumf>, %76, %cst_47 [1] : vector<8x8xf32> to vector<8xf32>
    %79 = vector.shape_cast %78 : vector<8xf32> to vector<8x1xf32>
    %80 = arith.maximumf %77, %79 : vector<8x1xf32>
    %81 = arith.subf %77, %80 : vector<8x1xf32>
    %82 = math.exp %81 : vector<8x1xf32>
    %83 = vector.broadcast %80 : vector<8x1xf32> to vector<8x8xf32>
    %84 = arith.subf %76, %83 : vector<8x8xf32>
    %85 = math.exp %84 : vector<8x8xf32>
    %c0_48 = arith.constant 0 : index
    %c1_49 = arith.constant 1 : index
    %86 = vector.load %arg17[%c0_48, %c1_49] : memref<8x4xf32, #tpu.memory_space<vmem>>, vector<8x1xf32>
    %87 = arith.mulf %82, %86 : vector<8x1xf32>
    %cst_50 = arith.constant dense<0.000000e+00> : vector<8xf32>
    %88 = vector.multi_reduction <add>, %85, %cst_50 [1] : vector<8x8xf32> to vector<8xf32>
    %89 = vector.shape_cast %88 : vector<8xf32> to vector<8x1xf32>
    %90 = arith.addf %87, %89 : vector<8x1xf32>
    %c0_51 = arith.constant 0 : index
    %c1_52 = arith.constant 1 : index
    %91 = vector.load %arg17[%c0_51, %c1_52] : memref<8x4xf32, #tpu.memory_space<vmem>>, vector<8x1xf32>
    tpu.vector_store %arg17[%c0_51, %c1_52], %90 {strides = array<i32>} : memref<8x4xf32, #tpu.memory_space<vmem>>, vector<8x1xf32>,
    %c0_53 = arith.constant 0 : index
    %c8_54 = arith.constant 8 : index
    %92 = vector.load %arg18[%c0_53, %c8_54] : memref<8x32xf32, #tpu.memory_space<vmem>>, vector<8x8xf32>
    %93 = vector.broadcast %82 : vector<8x1xf32> to vector<8x8xf32>
    %94 = arith.mulf %93, %92 : vector<8x8xf32>
    %cst_55 = arith.constant dense<0.000000e+00> : vector<8x8xf32>
    %95 = tpu.matmul %85, %71, %cst_55 {dimension_numbers = #tpu.dot_dimension_numbers<[1], [0], [0], [1], [0, 0, 1, 1], [], []>} : vector<8x8xf32>, vector<8x8xf32>, vector<8x8xf32> -> vector<8x8xf32>
    %96 = arith.addf %94, %95 : vector<8x8xf32>
    %c0_56 = arith.constant 0 : index
    %c8_57 = arith.constant 8 : index
    %97 = vector.load %arg18[%c0_56, %c8_57] : memref<8x32xf32, #tpu.memory_space<vmem>>, vector<8x8xf32>
    tpu.vector_store %arg18[%c0_56, %c8_57], %96 {strides = array<i32>} : memref<8x32xf32, #tpu.memory_space<vmem>>, vector<8x8xf32>,
    %c0_58 = arith.constant 0 : index
    %c1_59 = arith.constant 1 : index
    %98 = vector.load %arg16[%c0_58, %c1_59] : memref<8x4xf32, #tpu.memory_space<vmem>>, vector<8x1xf32>
    tpu.vector_store %arg16[%c0_58, %c1_59], %80 {strides = array<i32>} : memref<8x4xf32, #tpu.memory_space<vmem>>, vector<8x1xf32>,
    %c0_60 = arith.constant 0 : index
    %c16 = arith.constant 16 : index
    %99 = vector.load %arg15[%c0_60, %c16] : memref<8x32xf32, #tpu.memory_space<vmem>>, vector<8x8xf32>
    %100 = vector.extract_strided_slice %36 {offsets = [0, 16], sizes = [8, 8], strides = [1, 1]} : vector<8x64xf32> to vector<8x8xf32>
    %101 = vector.extract_strided_slice %36 {offsets = [0, 48], sizes = [8, 8], strides = [1, 1]} : vector<8x64xf32> to vector<8x8xf32>
    %cst_61 = arith.constant dense<0.000000e+00> : vector<8x8xf32>
    %102 = tpu.matmul %99, %100, %cst_61 {dimension_numbers = #tpu.dot_dimension_numbers<[1], [1], [0], [0], [0, 0, 1, 0], [], []>} : vector<8x8xf32>, vector<8x8xf32>, vector<8x8xf32> -> vector<8x8xf32>
    %cst_62 = arith.constant 5.000000e-01 : f32
    %103 = vector.broadcast %cst_62 : f32 to vector<8x8xf32>
    %104 = arith.cmpf ogt, %38, %103 : vector<8x8xf32>
    %cst_63 = arith.constant -1.000000e+30 : f32
    %105 = vector.broadcast %cst_63 : f32 to vector<8x8xf32>
    %106 = arith.select %104, %105, %102 : vector<8x8xi1>, vector<8x8xf32>
    %c0_64 = arith.constant 0 : index
    %c2 = arith.constant 2 : index
    %107 = vector.load %arg16[%c0_64, %c2] : memref<8x4xf32, #tpu.memory_space<vmem>>, vector<8x1xf32>
    %cst_65 = arith.constant dense<0xFF800000> : vector<8xf32>
    %108 = vector.multi_reduction <maximumf>, %106, %cst_65 [1] : vector<8x8xf32> to vector<8xf32>
    %109 = vector.shape_cast %108 : vector<8xf32> to vector<8x1xf32>
    %110 = arith.maximumf %107, %109 : vector<8x1xf32>
    %111 = arith.subf %107, %110 : vector<8x1xf32>
    %112 = math.exp %111 : vector<8x1xf32>
    %113 = vector.broadcast %110 : vector<8x1xf32> to vector<8x8xf32>
    %114 = arith.subf %106, %113 : vector<8x8xf32>
    %115 = math.exp %114 : vector<8x8xf32>
    %c0_66 = arith.constant 0 : index
    %c2_67 = arith.constant 2 : index
    %116 = vector.load %arg17[%c0_66, %c2_67] : memref<8x4xf32, #tpu.memory_space<vmem>>, vector<8x1xf32>
    %117 = arith.mulf %112, %116 : vector<8x1xf32>
    %cst_68 = arith.constant dense<0.000000e+00> : vector<8xf32>
    %118 = vector.multi_reduction <add>, %115, %cst_68 [1] : vector<8x8xf32> to vector<8xf32>
    %119 = vector.shape_cast %118 : vector<8xf32> to vector<8x1xf32>
    %120 = arith.addf %117, %119 : vector<8x1xf32>
    %c0_69 = arith.constant 0 : index
    %c2_70 = arith.constant 2 : index
    %121 = vector.load %arg17[%c0_69, %c2_70] : memref<8x4xf32, #tpu.memory_space<vmem>>, vector<8x1xf32>
    tpu.vector_store %arg17[%c0_69, %c2_70], %120 {strides = array<i32>} : memref<8x4xf32, #tpu.memory_space<vmem>>, vector<8x1xf32>,
    %c0_71 = arith.constant 0 : index
    %c16_72 = arith.constant 16 : index
    %122 = vector.load %arg18[%c0_71, %c16_72] : memref<8x32xf32, #tpu.memory_space<vmem>>, vector<8x8xf32>
    %123 = vector.broadcast %112 : vector<8x1xf32> to vector<8x8xf32>
    %124 = arith.mulf %123, %122 : vector<8x8xf32>
    %cst_73 = arith.constant dense<0.000000e+00> : vector<8x8xf32>
    %125 = tpu.matmul %115, %101, %cst_73 {dimension_numbers = #tpu.dot_dimension_numbers<[1], [0], [0], [1], [0, 0, 1, 1], [], []>} : vector<8x8xf32>, vector<8x8xf32>, vector<8x8xf32> -> vector<8x8xf32>
    %126 = arith.addf %124, %125 : vector<8x8xf32>
    %c0_74 = arith.constant 0 : index
    %c16_75 = arith.constant 16 : index
    %127 = vector.load %arg18[%c0_74, %c16_75] : memref<8x32xf32, #tpu.memory_space<vmem>>, vector<8x8xf32>
    tpu.vector_store %arg18[%c0_74, %c16_75], %126 {strides = array<i32>} : memref<8x32xf32, #tpu.memory_space<vmem>>, vector<8x8xf32>,
    %c0_76 = arith.constant 0 : index
    %c2_77 = arith.constant 2 : index
    %128 = vector.load %arg16[%c0_76, %c2_77] : memref<8x4xf32, #tpu.memory_space<vmem>>, vector<8x1xf32>
    tpu.vector_store %arg16[%c0_76, %c2_77], %110 {strides = array<i32>} : memref<8x4xf32, #tpu.memory_space<vmem>>, vector<8x1xf32>,
    %c0_78 = arith.constant 0 : index
    %c24 = arith.constant 24 : index
    %129 = vector.load %arg15[%c0_78, %c24] : memref<8x32xf32, #tpu.memory_space<vmem>>, vector<8x8xf32>
    %130 = vector.extract_strided_slice %36 {offsets = [0, 24], sizes = [8, 8], strides = [1, 1]} : vector<8x64xf32> to vector<8x8xf32>
    %131 = vector.extract_strided_slice %36 {offsets = [0, 56], sizes = [8, 8], strides = [1, 1]} : vector<8x64xf32> to vector<8x8xf32>
    %cst_79 = arith.constant dense<0.000000e+00> : vector<8x8xf32>
    %132 = tpu.matmul %129, %130, %cst_79 {dimension_numbers = #tpu.dot_dimension_numbers<[1], [1], [0], [0], [0, 0, 1, 0], [], []>} : vector<8x8xf32>, vector<8x8xf32>, vector<8x8xf32> -> vector<8x8xf32>
    %cst_80 = arith.constant 5.000000e-01 : f32
    %133 = vector.broadcast %cst_80 : f32 to vector<8x8xf32>
    %134 = arith.cmpf ogt, %38, %133 : vector<8x8xf32>
    %cst_81 = arith.constant -1.000000e+30 : f32
    %135 = vector.broadcast %cst_81 : f32 to vector<8x8xf32>
    %136 = arith.select %134, %135, %132 : vector<8x8xi1>, vector<8x8xf32>
    %c0_82 = arith.constant 0 : index
    %c3 = arith.constant 3 : index
    %137 = vector.load %arg16[%c0_82, %c3] : memref<8x4xf32, #tpu.memory_space<vmem>>, vector<8x1xf32>
    %cst_83 = arith.constant dense<0xFF800000> : vector<8xf32>
    %138 = vector.multi_reduction <maximumf>, %136, %cst_83 [1] : vector<8x8xf32> to vector<8xf32>
    %139 = vector.shape_cast %138 : vector<8xf32> to vector<8x1xf32>
    %140 = arith.maximumf %137, %139 : vector<8x1xf32>
    %141 = arith.subf %137, %140 : vector<8x1xf32>
    %142 = math.exp %141 : vector<8x1xf32>
    %143 = vector.broadcast %140 : vector<8x1xf32> to vector<8x8xf32>
    %144 = arith.subf %136, %143 : vector<8x8xf32>
    %145 = math.exp %144 : vector<8x8xf32>
    %c0_84 = arith.constant 0 : index
    %c3_85 = arith.constant 3 : index
    %146 = vector.load %arg17[%c0_84, %c3_85] : memref<8x4xf32, #tpu.memory_space<vmem>>, vector<8x1xf32>
    %147 = arith.mulf %142, %146 : vector<8x1xf32>
    %cst_86 = arith.constant dense<0.000000e+00> : vector<8xf32>
    %148 = vector.multi_reduction <add>, %145, %cst_86 [1] : vector<8x8xf32> to vector<8xf32>
    %149 = vector.shape_cast %148 : vector<8xf32> to vector<8x1xf32>
    %150 = arith.addf %147, %149 : vector<8x1xf32>
    %c0_87 = arith.constant 0 : index
    %c3_88 = arith.constant 3 : index
    %151 = vector.load %arg17[%c0_87, %c3_88] : memref<8x4xf32, #tpu.memory_space<vmem>>, vector<8x1xf32>
    tpu.vector_store %arg17[%c0_87, %c3_88], %150 {strides = array<i32>} : memref<8x4xf32, #tpu.memory_space<vmem>>, vector<8x1xf32>,
    %c0_89 = arith.constant 0 : index
    %c24_90 = arith.constant 24 : index
    %152 = vector.load %arg18[%c0_89, %c24_90] : memref<8x32xf32, #tpu.memory_space<vmem>>, vector<8x8xf32>
    %153 = vector.broadcast %142 : vector<8x1xf32> to vector<8x8xf32>
    %154 = arith.mulf %153, %152 : vector<8x8xf32>
    %cst_91 = arith.constant dense<0.000000e+00> : vector<8x8xf32>
    %155 = tpu.matmul %145, %131, %cst_91 {dimension_numbers = #tpu.dot_dimension_numbers<[1], [0], [0], [1], [0, 0, 1, 1], [], []>} : vector<8x8xf32>, vector<8x8xf32>, vector<8x8xf32> -> vector<8x8xf32>
    %156 = arith.addf %154, %155 : vector<8x8xf32>
    %c0_92 = arith.constant 0 : index
    %c24_93 = arith.constant 24 : index
    %157 = vector.load %arg18[%c0_92, %c24_93] : memref<8x32xf32, #tpu.memory_space<vmem>>, vector<8x8xf32>
    tpu.vector_store %arg18[%c0_92, %c24_93], %156 {strides = array<i32>} : memref<8x32xf32, #tpu.memory_space<vmem>>, vector<8x8xf32>,
    %c0_94 = arith.constant 0 : index
    %c3_95 = arith.constant 3 : index
    %158 = vector.load %arg16[%c0_94, %c3_95] : memref<8x4xf32, #tpu.memory_space<vmem>>, vector<8x1xf32>
    tpu.vector_store %arg16[%c0_94, %c3_95], %140 {strides = array<i32>} : memref<8x4xf32, #tpu.memory_space<vmem>>, vector<8x1xf32>,
    %c2_i32_96 = arith.constant 2 : i32
    %159 = arith.cmpi eq, %arg2, %c2_i32_96 : i32
    %c0_i32_97 = arith.constant 0 : i32
    %160 = arith.cmpi eq, %arg3, %c0_i32_97 : i32
    %161 = arith.andi %159, %160 : i1
    %162 = arith.extui %161 : i1 to i32
    %c0_i32_98 = arith.constant 0 : i32
    %163 = arith.cmpi ne, %162, %c0_i32_98 : i32
    scf.if %163 {
      %c0_99 = arith.constant 0 : index
      %c0_100 = arith.constant 0 : index
      %c0_101 = arith.constant 0 : index
      %164 = vector.load %arg4[%c0_99, %c0_100, %c0_101] : memref<1x8x32xf32, #tpu.memory_space<vmem>>, vector<1x8x32xf32>
      %165 = vector.shape_cast %164 : vector<1x8x32xf32> to vector<8x32xf32>
      %cst_102 = arith.constant dense<0.000000e+00> : vector<8xf32>
      %166 = vector.multi_reduction <add>, %165, %cst_102 [1] : vector<8x32xf32> to vector<8xf32>
      %167 = vector.shape_cast %166 : vector<8xf32> to vector<8x1xf32>
      %cst_103 = arith.constant 3.200000e+01 : f32
      %168 = vector.broadcast %cst_103 : f32 to vector<8x1xf32>
      %169 = arith.divf %167, %168 : vector<8x1xf32>
      %170 = vector.broadcast %169 : vector<8x1xf32> to vector<8x32xf32>
      %171 = arith.subf %165, %170 : vector<8x32xf32>
      %172 = arith.mulf %171, %171 : vector<8x32xf32>
      %cst_104 = arith.constant dense<0.000000e+00> : vector<8xf32>
      %173 = vector.multi_reduction <add>, %172, %cst_104 [1] : vector<8x32xf32> to vector<8xf32>
      %174 = vector.shape_cast %173 : vector<8xf32> to vector<8x1xf32>
      %cst_105 = arith.constant 3.200000e+01 : f32
      %175 = vector.broadcast %cst_105 : f32 to vector<8x1xf32>
      %176 = arith.divf %174, %175 : vector<8x1xf32>
      %177 = vector.broadcast %169 : vector<8x1xf32> to vector<8x32xf32>
      %178 = arith.subf %165, %177 : vector<8x32xf32>
      %cst_106 = arith.constant 9.99999997E-7 : f32
      %179 = vector.broadcast %cst_106 : f32 to vector<8x1xf32>
      %180 = arith.addf %176, %179 : vector<8x1xf32>
      %181 = math.rsqrt %180 : vector<8x1xf32>
      %182 = vector.broadcast %181 : vector<8x1xf32> to vector<8x32xf32>
      %183 = arith.mulf %178, %182 : vector<8x32xf32>
      %184 = vector.broadcast %0 : vector<1x32xf32> to vector<8x32xf32>
      %185 = arith.mulf %183, %184 : vector<8x32xf32>
      %186 = vector.broadcast %1 : vector<1x32xf32> to vector<8x32xf32>
      %187 = arith.addf %185, %186 : vector<8x32xf32>
      %c0_107 = arith.constant 0 : index
      %c0_108 = arith.constant 0 : index
      %c0_109 = arith.constant 0 : index
      %188 = vector.load %arg14[%c0_107, %c0_108, %c0_109] : memref<1x8x32xf32, #tpu.memory_space<vmem>>, vector<1x8x32xf32>
      %189 = vector.shape_cast %188 : vector<1x8x32xf32> to vector<8x32xf32>
      %190 = vector.shape_cast %187 : vector<8x32xf32> to vector<1x8x32xf32>
      tpu.vector_store %arg14[%c0_107, %c0_108, %c0_109], %190 {strides = array<i32>} : memref<1x8x32xf32, #tpu.memory_space<vmem>>, vector<1x8x32xf32>,
      %c0_110 = arith.constant 0 : index
      %c0_111 = arith.constant 0 : index
      %191 = vector.load %arg17[%c0_110, %c0_111] : memref<8x4xf32, #tpu.memory_space<vmem>>, vector<8x4xf32>
      %192 = tpu.reciprocal %191 {approx = true} : vector<8x4xf32> -> vector<8x4xf32>
      %c0_112 = arith.constant 0 : index
      %c0_113 = arith.constant 0 : index
      %193 = vector.load %arg18[%c0_112, %c0_113] : memref<8x32xf32, #tpu.memory_space<vmem>>, vector<8x8xf32>
      %194 = vector.extract_strided_slice %192 {offsets = [0, 0], sizes = [8, 1], strides = [1, 1]} : vector<8x4xf32> to vector<8x1xf32>
      %195 = vector.broadcast %194 : vector<8x1xf32> to vector<8x8xf32>
      %196 = arith.mulf %193, %195 : vector<8x8xf32>
      %c0_114 = arith.constant 0 : index
      %c0_115 = arith.constant 0 : index
      %197 = vector.load %arg18[%c0_114, %c0_115] : memref<8x32xf32, #tpu.memory_space<vmem>>, vector<8x8xf32>
      tpu.vector_store %arg18[%c0_114, %c0_115], %196 {strides = array<i32>} : memref<8x32xf32, #tpu.memory_space<vmem>>, vector<8x8xf32>,
      %c0_116 = arith.constant 0 : index
      %c8_117 = arith.constant 8 : index
      %198 = vector.load %arg18[%c0_116, %c8_117] : memref<8x32xf32, #tpu.memory_space<vmem>>, vector<8x8xf32>
      %199 = vector.extract_strided_slice %192 {offsets = [0, 1], sizes = [8, 1], strides = [1, 1]} : vector<8x4xf32> to vector<8x1xf32>
      %200 = vector.broadcast %199 : vector<8x1xf32> to vector<8x8xf32>
      %201 = arith.mulf %198, %200 : vector<8x8xf32>
      %c0_118 = arith.constant 0 : index
      %c8_119 = arith.constant 8 : index
      %202 = vector.load %arg18[%c0_118, %c8_119] : memref<8x32xf32, #tpu.memory_space<vmem>>, vector<8x8xf32>
      tpu.vector_store %arg18[%c0_118, %c8_119], %201 {strides = array<i32>} : memref<8x32xf32, #tpu.memory_space<vmem>>, vector<8x8xf32>,
      %c0_120 = arith.constant 0 : index
      %c16_121 = arith.constant 16 : index
      %203 = vector.load %arg18[%c0_120, %c16_121] : memref<8x32xf32, #tpu.memory_space<vmem>>, vector<8x8xf32>
      %204 = vector.extract_strided_slice %192 {offsets = [0, 2], sizes = [8, 1], strides = [1, 1]} : vector<8x4xf32> to vector<8x1xf32>
      %205 = vector.broadcast %204 : vector<8x1xf32> to vector<8x8xf32>
      %206 = arith.mulf %203, %205 : vector<8x8xf32>
      %c0_122 = arith.constant 0 : index
      %c16_123 = arith.constant 16 : index
      %207 = vector.load %arg18[%c0_122, %c16_123] : memref<8x32xf32, #tpu.memory_space<vmem>>, vector<8x8xf32>
      tpu.vector_store %arg18[%c0_122, %c16_123], %206 {strides = array<i32>} : memref<8x32xf32, #tpu.memory_space<vmem>>, vector<8x8xf32>,
      %c0_124 = arith.constant 0 : index
      %c24_125 = arith.constant 24 : index
      %208 = vector.load %arg18[%c0_124, %c24_125] : memref<8x32xf32, #tpu.memory_space<vmem>>, vector<8x8xf32>
      %209 = vector.extract_strided_slice %192 {offsets = [0, 3], sizes = [8, 1], strides = [1, 1]} : vector<8x4xf32> to vector<8x1xf32>
      %210 = vector.broadcast %209 : vector<8x1xf32> to vector<8x8xf32>
      %211 = arith.mulf %208, %210 : vector<8x8xf32>
      %c0_126 = arith.constant 0 : index
      %c24_127 = arith.constant 24 : index
      %212 = vector.load %arg18[%c0_126, %c24_127] : memref<8x32xf32, #tpu.memory_space<vmem>>, vector<8x8xf32>
      tpu.vector_store %arg18[%c0_126, %c24_127], %211 {strides = array<i32>} : memref<8x32xf32, #tpu.memory_space<vmem>>, vector<8x8xf32>,
      %c0_128 = arith.constant 0 : index
      %c0_129 = arith.constant 0 : index
      %213 = vector.load %arg18[%c0_128, %c0_129] : memref<8x32xf32, #tpu.memory_space<vmem>>, vector<8x32xf32>
      %c0_130 = arith.constant 0 : index
      %c0_131 = arith.constant 0 : index
      %214 = vector.load %arg12[%c0_130, %c0_131] : memref<32x32xf32, #tpu.memory_space<vmem>>, vector<32x32xf32>
      %cst_132 = arith.constant dense<0.000000e+00> : vector<8x32xf32>
      %215 = tpu.matmul %213, %214, %cst_132 {dimension_numbers = #tpu.dot_dimension_numbers<[1], [0], [0], [1], [0, 0, 1, 1], [], []>} : vector<8x32xf32>, vector<32x32xf32>, vector<8x32xf32> -> vector<8x32xf32>
      %c0_133 = arith.constant 0 : index
      %c0_134 = arith.constant 0 : index
      %c0_135 = arith.constant 0 : index
      %216 = vector.load %arg13[%c0_133, %c0_134, %c0_135] : memref<1x8x32xf32, #tpu.memory_space<vmem>>, vector<1x8x32xf32>
      %217 = vector.shape_cast %216 : vector<1x8x32xf32> to vector<8x32xf32>
      %218 = vector.shape_cast %215 : vector<8x32xf32> to vector<1x8x32xf32>
      tpu.vector_store %arg13[%c0_133, %c0_134, %c0_135], %218 {strides = array<i32>} : memref<1x8x32xf32, #tpu.memory_space<vmem>>, vector<1x8x32xf32>,
    } else {
    }
    return
  }
  func.func @transform_0(%arg0: i32, %arg1: i32, %arg2: i32, %arg3: i32) -> (i32, i32, i32) {
    %c0_i32 = arith.constant 0 : i32
    %c0_i32_0 = arith.constant 0 : i32
    return %arg0, %arg1, %c0_i32 : i32, i32, i32
  }
  func.func @transform_1(%arg0: i32, %arg1: i32, %arg2: i32, %arg3: i32) -> (i32, i32, i32) {
    %c0_i32 = arith.constant 0 : i32
    %c0_i32_0 = arith.constant 0 : i32
    return %arg0, %arg3, %c0_i32 : i32, i32, i32
  }
  func.func @transform_2(%arg0: i32, %arg1: i32, %arg2: i32, %arg3: i32) -> (i32, i32, i32, i32) {
    %c1_i32 = arith.constant 1 : i32
    %0 = arith.minsi %arg2, %c1_i32 : i32
    %c0_i32 = arith.constant 0 : i32
    %c0_i32_0 = arith.constant 0 : i32
    return %0, %arg0, %arg3, %c0_i32 : i32, i32, i32, i32
  }
  func.func @transform_3(%arg0: i32, %arg1: i32, %arg2: i32, %arg3: i32) -> (i32, i32, i32) {
    %c0_i32 = arith.constant 0 : i32
    return %arg0, %arg1, %arg3 : i32, i32, i32
  }
  func.func @transform_4(%arg0: i32, %arg1: i32, %arg2: i32, %arg3: i32) -> (i32, i32) {
    %c0_i32 = arith.constant 0 : i32
    %c0_i32_0 = arith.constant 0 : i32
    %c0_i32_1 = arith.constant 0 : i32
    return %c0_i32, %c0_i32_0 : i32, i32
  }
  func.func @transform_5(%arg0: i32, %arg1: i32, %arg2: i32, %arg3: i32) -> (i32, i32) {
    %c0_i32 = arith.constant 0 : i32
    %c0_i32_0 = arith.constant 0 : i32
    %c0_i32_1 = arith.constant 0 : i32
    return %c0_i32, %c0_i32_0 : i32, i32
  }
  func.func @transform_6(%arg0: i32, %arg1: i32, %arg2: i32, %arg3: i32) -> (i32, i32) {
    %c0_i32 = arith.constant 0 : i32
    %c0_i32_0 = arith.constant 0 : i32
    %c0_i32_1 = arith.constant 0 : i32
    return %c0_i32, %c0_i32_0 : i32, i32
  }
  func.func @transform_7(%arg0: i32, %arg1: i32, %arg2: i32, %arg3: i32) -> (i32, i32) {
    %c0_i32 = arith.constant 0 : i32
    %c0_i32_0 = arith.constant 0 : i32
    %c0_i32_1 = arith.constant 0 : i32
    return %c0_i32, %c0_i32_0 : i32, i32
  }
  func.func @transform_8(%arg0: i32, %arg1: i32, %arg2: i32, %arg3: i32) -> (i32, i32) {
    %c0_i32 = arith.constant 0 : i32
    %c0_i32_0 = arith.constant 0 : i32
    %c0_i32_1 = arith.constant 0 : i32
    return %c0_i32, %c0_i32_0 : i32, i32
  }
  func.func @transform_9(%arg0: i32, %arg1: i32, %arg2: i32, %arg3: i32) -> (i32, i32, i32) {
    %c0_i32 = arith.constant 0 : i32
    %c0_i32_0 = arith.constant 0 : i32
    return %arg0, %arg1, %c0_i32 : i32, i32, i32
  }
  func.func @transform_10(%arg0: i32, %arg1: i32, %arg2: i32, %arg3: i32) -> (i32, i32, i32) {
    %c0_i32 = arith.constant 0 : i32
    %c0_i32_0 = arith.constant 0 : i32
    return %arg0, %arg1, %c0_i32 : i32, i32, i32
  }
}

</mosaic_0001>

<llo_original>
// kernel: tpu_custom_call.1
$region0: #{tpu_custom_call.1}
  #allocation0 [shape = 'u32[]', space=smem, size = 0x4, offset = 0x4, fixed_abs, tag = 'smem constant byte address 0x4 - core index']
  #allocation1 [shape = 'u32[144,128]{1,0:T(1,128)}', space=vmem, size = 0x12000, scoped, tag = 'internal scratch']
  #allocation2 [shape = 'f32[8,32]{1,0:T(8,128)}', space=vmem, size = 0x1000, scoped, tag = 'scratch operand']
  #allocation3 [shape = 'f32[8,4]{1,0:T(8,128)}', space=vmem, size = 0x1000, scoped, tag = 'scratch operand']
  #allocation4 [shape = 'f32[8,4]{1,0:T(8,128)}', space=vmem, size = 0x1000, scoped, tag = 'scratch operand']
  #allocation5 [shape = 'f32[8,32]{1,0:T(8,128)}', space=vmem, size = 0x1000, scoped, tag = 'scratch operand']
  %s0 = inlined_call_operand.hbm [shape: f32[2,8,32], index: 0, kind: input, shape index: {}]
  %s1 = inlined_call_operand.hbm [shape: f32[2,8,32], index: 1, kind: input, shape index: {}]
  %s2 = inlined_call_operand.hbm [shape: f32[2,2,8,32], index: 2, kind: input, shape index: {}]
  %s3 = inlined_call_operand.hbm [shape: f32[2,8,8], index: 3, kind: input, shape index: {}]
  %s4 = inlined_call_operand.vmem [shape: f32[1,32], index: 4, kind: input, shape index: {}]
  %s5 = inlined_call_operand.vmem [shape: f32[1,32], index: 5, kind: input, shape index: {}]
  %s6 = inlined_call_operand.hbm [shape: f32[32,32], index: 6, kind: input, shape index: {}]
  %s7 = inlined_call_operand.hbm [shape: f32[32,64], index: 7, kind: input, shape index: {}]
  %s8 = inlined_call_operand.hbm [shape: f32[32,32], index: 8, kind: input, shape index: {}]
  %s9 = inlined_call_operand.hbm [shape: f32[2,8,32], index: 9, kind: output, shape index: {0}]
  %s10 = inlined_call_operand.hbm [shape: f32[2,8,32], index: 10, kind: output, shape index: {1}]
  %11 = xla_tuple %s9, %s10
  %s12 = sld [smem:[#allocation0]]
  $region113: #{tpu_custom_call.1} parent=0
    _
  %s14 = ssub.s32 1, %s12
  %s15 = scalar_select 0, %s14, %s12
  $region1: #{tpu_custom_call.1} parent=0
    #allocation6 [shape = 'u8[8192]{0}', space=vmem, size = 0x2000, scoped, tag = 'input window, operand 0']
    #allocation7 [shape = 's32[2]{0}', space=sflag, size = 0x8, scoped, tag = 'scoped memory for tpu_custom_call.1']
    #allocation8 [shape = 's32[2]{0}', space=sflag, size = 0x8, scoped, tag = 'scoped memory for tpu_custom_call.1']
    #allocation9 [shape = 'u8[8192]{0}', space=vmem, size = 0x2000, scoped, tag = 'input window, operand 1']
    #allocation10 [shape = 's32[2]{0}', space=sflag, size = 0x8, scoped, tag = 'scoped memory for tpu_custom_call.1']
    #allocation11 [shape = 'u8[8192]{0}', space=vmem, size = 0x2000, scoped, tag = 'input window, operand 2']
    #allocation12 [shape = 'u8[8192]{0}', space=vmem, size = 0x2000, scoped, tag = 'input window, operand 3']
    #allocation13 [shape = 's32[2]{0}', space=sflag, size = 0x8, scoped, tag = 'scoped memory for tpu_custom_call.1']
    #allocation14 [shape = 'u8[16384]{0}', space=vmem, size = 0x4000, scoped, tag = 'input window, operand 6, single buffered']
    #allocation15 [shape = 'u8[16384]{0}', space=vmem, size = 0x4000, scoped, tag = 'input window, operand 7, single buffered']
    #allocation16 [shape = 's32[1]{0}', space=sflag, size = 0x4, scoped, tag = 'scoped memory for tpu_custom_call.1']
    #allocation17 [shape = 'u8[16384]{0}', space=vmem, size = 0x4000, scoped, tag = 'input window, operand 8, single buffered']
    #allocation18 [shape = 'u8[8192]{0}', space=vmem, size = 0x2000, scoped, tag = 'output window, operand 0']
    #allocation19 [shape = 'u8[8192]{0}', space=vmem, size = 0x2000, scoped, tag = 'output window, operand 1']
    #allocation20 [shape = 's32[2]{0}', space=sflag, size = 0x8, scoped, tag = 'scoped memory for tpu_custom_call.1']
    %16 = vsyncpa [#allocation7], 0
    %s17 = scalar_lea.sflag [#allocation7], 1
    %18 = vsyncpa %s17, 0
    %19 = vsyncpa [#allocation10], 0
    %s20 = scalar_lea.sflag [#allocation10], 1
    %21 = vsyncpa %s20, 0
    %22 = vsyncpa [#allocation13], 0
    %s23 = scalar_lea.sflag [#allocation13], 1
    %24 = vsyncpa %s23, 0
    %25 = vsyncpa [#allocation16], 0
    %26 = vsyncpa [#allocation8], 0
    %s27 = scalar_lea.sflag [#allocation8], 1
    %28 = vsyncpa %s27, 0
    %29 = vsyncpa [#allocation20], 0
    %s30 = scalar_lea.sflag [#allocation20], 1
    %31 = vsyncpa %s30, 0
    loop: start=0, step=1, limit=8
    $region2: #{tpu_custom_call.1} parent=1 // loop_pre_header
      _
    $region3: #{tpu_custom_call.1} parent=1 // loop_header
      %s33 = sphi 0, %s37
      %p34 = scmp.ge.s32.totalorder %s33, 8
      %s40 = sphi 0, %s66
      %s41 = sphi 0, %s62
      %s42 = sphi 0, %s58
      %s43 = sphi 0, %s54
      %s44 = sphi 0, %s40
      %s45 = sphi 0, %s41
      %s46 = sphi 0, %s42
      %s47 = sphi 0, %s43
      %s48 = sphi 0, %s44
      %s49 = sphi 0, %s45
      %s50 = sphi 0, %s46
      %s51 = sphi 0, %s47
      %s71 = sphi 0, %s73
      %s74 = sphi 0, %s71
      %s75 = sphi 0, %s74
      %s91 = sphi 0, %s75
      %s99 = sphi 0, %s101
      %s102 = sphi 0, %s99
      %s103 = sphi 0, %s102
      %s119 = sphi 0, %s103
      %s133 = sphi 0, %s135
      %s136 = sphi 0, %s133
      %s137 = sphi 0, %s136
      %s153 = sphi 0, %s137
      %s163 = sphi 0, %s165
      %s166 = sphi 0, %s163
      %s167 = sphi 0, %s166
      %s183 = sphi 0, %s167
      %s187 = sphi 0, %s187
      %s189 = sphi 0, %s187
      %s190 = sphi 0, %s189
      %s204 = sphi 0, %s190
      %s208 = sphi 0, %s208
      %s210 = sphi 0, %s208
      %s211 = sphi 0, %s210
      %s225 = sphi 0, %s211
      %s229 = sphi 0, %s229
      %s231 = sphi 0, %s229
      %s232 = sphi 0, %s231
      %s246 = sphi 0, %s232
      %s250 = sphi 0, %s250
      %s252 = sphi 0, %s250
      %s253 = sphi 0, %s252
      %s267 = sphi 0, %s253
      %s271 = sphi 0, %s271
      %s273 = sphi 0, %s271
      %s274 = sphi 0, %s273
      %s288 = sphi 0, %s274
      %s296 = sphi 0, %s298
      %s299 = sphi 0, %s296
      %s300 = sphi 0, %s299
      %s316 = sphi 0, %s300
      %s324 = sphi 0, %s326
      %s327 = sphi 0, %s324
      %s328 = sphi 0, %s327
      %s344 = sphi 0, %s328
    $region4: #{tpu_custom_call.1} parent=1 // loop_header_branch
      %36 = sbr.rel (%p34) target = $region8
    $region5: #{tpu_custom_call.1} parent=1 // loop_body
      %s38 = ssub.s32 %s33, 1
      %s39 = ssub.s32 %s33, 2
      %s52 = sadd.s32 1, %s43
      %p53 = scmp.ge.s32.totalorder %s52, 1
      %s54 = scalar_select %p53, 0, %s52
      %s55 = sadd.s32 1, %s42
      %s56 = scalar_select %p53, %s55, %s42
      %p57 = scmp.ge.s32.totalorder %s56, 3
      %s58 = scalar_select %p57, 0, %s56
      %s59 = sadd.s32 1, %s41
      %s60 = scalar_select %p57, %s59, %s41
      %p61 = scmp.ge.s32.totalorder %s60, 1
      %s62 = scalar_select %p61, 0, %s60
      %s63 = sadd.s32 1, %s40
      %s64 = scalar_select %p61, %s63, %s40
      %p65 = scmp.ge.s32.totalorder %s64, 2
      %s66 = scalar_select %p65, 0, %s64
      %s67 = ssub.s32 %s40, %s66
      %s68 = ssub.s32 %s41, %s62
      %s69 = sor.u32 %s67, %s68
      %p70 = scmp.eq.s32.totalorder %s69, 0
      %s72 = sadd.s32 %s71, 1
      %s73 = scalar_select %p70, %s71, %s72
      %p76 = pneg %p70
      %p77 = scmp.eq.s32.totalorder %s33, 5
      %p78 = por %p76, %p77
      %p79 = scmp.ne.s32.totalorder %s71, %s74
      %p80 = scmp.eq.s32.totalorder %s33, 0
      %p81 = por %p79, %p80
      %p82 = scmp.ne.s32.totalorder %s71, %s74
      %p83 = scmp.eq.s32.totalorder %s38, 5
      %p84 = por %p82, %p83
      %p85 = scmp.ne.s32.totalorder %s74, %s75
      %p86 = scmp.eq.s32.totalorder %s38, 0
      %p87 = por %p85, %p86
      %p88 = scmp.ne.s32.totalorder %s74, %s75
      %p89 = scmp.eq.s32.totalorder %s39, 5
      %p90 = por %p88, %p89
      %p92 = scmp.ne.s32.totalorder %s75, %s91
      %p93 = scmp.eq.s32.totalorder %s39, 0
      %p94 = por %p92, %p93
      %s95 = ssub.s32 %s40, %s66
      %s96 = ssub.s32 %s43, %s54
      %s97 = sor.u32 %s95, %s96
      %p98 = scmp.eq.s32.totalorder %s97, 0
      %s100 = sadd.s32 %s99, 1
      %s101 = scalar_select %p98, %s99, %s100
      %p104 = pneg %p98
      %p105 = scmp.eq.s32.totalorder %s33, 5
      %p106 = por %p104, %p105
      %p107 = scmp.ne.s32.totalorder %s99, %s102
      %p108 = scmp.eq.s32.totalorder %s33, 0
      %p109 = por %p107, %p108
      %p110 = scmp.ne.s32.totalorder %s99, %s102
      %p111 = scmp.eq.s32.totalorder %s38, 5
      %p112 = por %p110, %p111
      %p113 = scmp.ne.s32.totalorder %s102, %s103
      %p114 = scmp.eq.s32.totalorder %s38, 0
      %p115 = por %p113, %p114
      %p116 = scmp.ne.s32.totalorder %s102, %s103
      %p117 = scmp.eq.s32.totalorder %s39, 5
      %p118 = por %p116, %p117
      %p120 = scmp.ne.s32.totalorder %s103, %s119
      %p121 = scmp.eq.s32.totalorder %s39, 0
      %p122 = por %p120, %p121
      %p123 = scmp.lt.s32.totalorder %s42, 1
      %s124 = scalar_select %p123, %s42, 1
      %p125 = scmp.lt.s32.totalorder %s58, 1
      %s126 = scalar_select %p125, %s58, 1
      %s127 = ssub.s32 %s124, %s126
      %s128 = ssub.s32 %s40, %s66
      %s129 = sor.u32 %s127, %s128
      %s130 = ssub.s32 %s43, %s54
      %s131 = sor.u32 %s129, %s130
      %p132 = scmp.eq.s32.totalorder %s131, 0
      %s134 = sadd.s32 %s133, 1
      %s135 = scalar_select %p132, %s133, %s134
      %p138 = pneg %p132
      %p139 = scmp.eq.s32.totalorder %s33, 5
      %p140 = por %p138, %p139
      %p141 = scmp.ne.s32.totalorder %s133, %s136
      %p142 = scmp.eq.s32.totalorder %s33, 0
      %p143 = por %p141, %p142
      %p144 = scmp.ne.s32.totalorder %s133, %s136
      %p145 = scmp.eq.s32.totalorder %s38, 5
      %p146 = por %p144, %p145
      %p147 = scmp.ne.s32.totalorder %s136, %s137
      %p148 = scmp.eq.s32.totalorder %s38, 0
      %p149 = por %p147, %p148
      %p150 = scmp.ne.s32.totalorder %s136, %s137
      %p151 = scmp.eq.s32.totalorder %s39, 5
      %p152 = por %p150, %p151
      %p154 = scmp.ne.s32.totalorder %s137, %s153
      %p155 = scmp.eq.s32.totalorder %s39, 0
      %p156 = por %p154, %p155
      %s157 = ssub.s32 %s40, %s66
      %s158 = ssub.s32 %s41, %s62
      %s159 = sor.u32 %s157, %s158
      %s160 = ssub.s32 %s43, %s54
      %s161 = sor.u32 %s159, %s160
      %p162 = scmp.eq.s32.totalorder %s161, 0
      %s164 = sadd.s32 %s163, 1
      %s165 = scalar_select %p162, %s163, %s164
      %p168 = pneg %p162
      %p169 = scmp.eq.s32.totalorder %s33, 5
      %p170 = por %p168, %p169
      %p171 = scmp.ne.s32.totalorder %s163, %s166
      %p172 = scmp.eq.s32.totalorder %s33, 0
      %p173 = por %p171, %p172
      %p174 = scmp.ne.s32.totalorder %s163, %s166
      %p175 = scmp.eq.s32.totalorder %s38, 5
      %p176 = por %p174, %p175
      %p177 = scmp.ne.s32.totalorder %s166, %s167
      %p178 = scmp.eq.s32.totalorder %s38, 0
      %p179 = por %p177, %p178
      %p180 = scmp.ne.s32.totalorder %s166, %s167
      %p181 = scmp.eq.s32.totalorder %s39, 5
      %p182 = por %p180, %p181
      %p184 = scmp.ne.s32.totalorder %s167, %s183
      %p185 = scmp.eq.s32.totalorder %s39, 0
      %p186 = por %p184, %p185
      %s188 = sadd.s32 %s187, 1
      %p191 = scmp.eq.s32.totalorder %s33, 5
      %p192 = scmp.ne.s32.totalorder %s187, %s189
      %p193 = scmp.eq.s32.totalorder %s33, 0
      %p194 = por %p192, %p193
      %p195 = scmp.ne.s32.totalorder %s187, %s189
      %p196 = scmp.eq.s32.totalorder %s38, 5
      %p197 = por %p195, %p196
      %p198 = scmp.ne.s32.totalorder %s189, %s190
      %p199 = scmp.eq.s32.totalorder %s38, 0
      %p200 = por %p198, %p199
      %p201 = scmp.ne.s32.totalorder %s189, %s190
      %p202 = scmp.eq.s32.totalorder %s39, 5
      %p203 = por %p201, %p202
      %p205 = scmp.ne.s32.totalorder %s190, %s204
      %p206 = scmp.eq.s32.totalorder %s39, 0
      %p207 = por %p205, %p206
      %s209 = sadd.s32 %s208, 1
      %p212 = scmp.eq.s32.totalorder %s33, 5
      %p213 = scmp.ne.s32.totalorder %s208, %s210
      %p214 = scmp.eq.s32.totalorder %s33, 0
      %p215 = por %p213, %p214
      %p216 = scmp.ne.s32.totalorder %s208, %s210
      %p217 = scmp.eq.s32.totalorder %s38, 5
      %p218 = por %p216, %p217
      %p219 = scmp.ne.s32.totalorder %s210, %s211
      %p220 = scmp.eq.s32.totalorder %s38, 0
      %p221 = por %p219, %p220
      %p222 = scmp.ne.s32.totalorder %s210, %s211
      %p223 = scmp.eq.s32.totalorder %s39, 5
      %p224 = por %p222, %p223
      %p226 = scmp.ne.s32.totalorder %s211, %s225
      %p227 = scmp.eq.s32.totalorder %s39, 0
      %p228 = por %p226, %p227
      %s230 = sadd.s32 %s229, 1
      %p233 = scmp.eq.s32.totalorder %s33, 5
      %p234 = scmp.ne.s32.totalorder %s229, %s231
      %p235 = scmp.eq.s32.totalorder %s33, 0
      %p236 = por %p234, %p235
      %p237 = scmp.ne.s32.totalorder %s229, %s231
      %p238 = scmp.eq.s32.totalorder %s38, 5
      %p239 = por %p237, %p238
      %p240 = scmp.ne.s32.totalorder %s231, %s232
      %p241 = scmp.eq.s32.totalorder %s38, 0
      %p242 = por %p240, %p241
      %p243 = scmp.ne.s32.totalorder %s231, %s232
      %p244 = scmp.eq.s32.totalorder %s39, 5
      %p245 = por %p243, %p244
      %p247 = scmp.ne.s32.totalorder %s232, %s246
      %p248 = scmp.eq.s32.totalorder %s39, 0
      %p249 = por %p247, %p248
      %s251 = sadd.s32 %s250, 1
      %p254 = scmp.eq.s32.totalorder %s33, 5
      %p255 = scmp.ne.s32.totalorder %s250, %s252
      %p256 = scmp.eq.s32.totalorder %s33, 0
      %p257 = por %p255, %p256
      %p258 = scmp.ne.s32.totalorder %s250, %s252
      %p259 = scmp.eq.s32.totalorder %s38, 5
      %p260 = por %p258, %p259
      %p261 = scmp.ne.s32.totalorder %s252, %s253
      %p262 = scmp.eq.s32.totalorder %s38, 0
      %p263 = por %p261, %p262
      %p264 = scmp.ne.s32.totalorder %s252, %s253
      %p265 = scmp.eq.s32.totalorder %s39, 5
      %p266 = por %p264, %p265
      %p268 = scmp.ne.s32.totalorder %s253, %s267
      %p269 = scmp.eq.s32.totalorder %s39, 0
      %p270 = por %p268, %p269
      %s272 = sadd.s32 %s271, 1
      %p275 = scmp.eq.s32.totalorder %s33, 5
      %p276 = scmp.ne.s32.totalorder %s271, %s273
      %p277 = scmp.eq.s32.totalorder %s33, 0
      %p278 = por %p276, %p277
      %p279 = scmp.ne.s32.totalorder %s271, %s273
      %p280 = scmp.eq.s32.totalorder %s38, 5
      %p281 = por %p279, %p280
      %p282 = scmp.ne.s32.totalorder %s273, %s274
      %p283 = scmp.eq.s32.totalorder %s38, 0
      %p284 = por %p282, %p283
      %p285 = scmp.ne.s32.totalorder %s273, %s274
      %p286 = scmp.eq.s32.totalorder %s39, 5
      %p287 = por %p285, %p286
      %p289 = scmp.ne.s32.totalorder %s274, %s288
      %p290 = scmp.eq.s32.totalorder %s39, 0
      %p291 = por %p289, %p290
      %s292 = ssub.s32 %s40, %s66
      %s293 = ssub.s32 %s41, %s62
      %s294 = sor.u32 %s292, %s293
      %p295 = scmp.eq.s32.totalorder %s294, 0
      %s297 = sadd.s32 %s296, 1
      %s298 = scalar_select %p295, %s296, %s297
      %p301 = pneg %p295
      %p302 = scmp.eq.s32.totalorder %s33, 5
      %p303 = por %p301, %p302
      %p304 = scmp.ne.s32.totalorder %s296, %s299
      %p305 = scmp.eq.s32.totalorder %s33, 0
      %p306 = por %p304, %p305
      %p307 = scmp.ne.s32.totalorder %s296, %s299
      %p308 = scmp.eq.s32.totalorder %s38, 5
      %p309 = por %p307, %p308
      %p310 = scmp.ne.s32.totalorder %s299, %s300
      %p311 = scmp.eq.s32.totalorder %s38, 0
      %p312 = por %p310, %p311
      %p313 = scmp.ne.s32.totalorder %s299, %s300
      %p314 = scmp.eq.s32.totalorder %s39, 5
      %p315 = por %p313, %p314
      %p317 = scmp.ne.s32.totalorder %s300, %s316
      %p318 = scmp.eq.s32.totalorder %s39, 0
      %p319 = por %p317, %p318
      %s320 = ssub.s32 %s40, %s66
      %s321 = ssub.s32 %s41, %s62
      %s322 = sor.u32 %s320, %s321
      %p323 = scmp.eq.s32.totalorder %s322, 0
      %s325 = sadd.s32 %s324, 1
      %s326 = scalar_select %p323, %s324, %s325
      %p329 = pneg %p323
      %p330 = scmp.eq.s32.totalorder %s33, 5
      %p331 = por %p329, %p330
      %p332 = scmp.ne.s32.totalorder %s324, %s327
      %p333 = scmp.eq.s32.totalorder %s33, 0
      %p334 = por %p332, %p333
      %p335 = scmp.ne.s32.totalorder %s324, %s327
      %p336 = scmp.eq.s32.totalorder %s38, 5
      %p337 = por %p335, %p336
      %p338 = scmp.ne.s32.totalorder %s327, %s328
      %p339 = scmp.eq.s32.totalorder %s38, 0
      %p340 = por %p338, %p339
      %p341 = scmp.ne.s32.totalorder %s327, %s328
      %p342 = scmp.eq.s32.totalorder %s39, 5
      %p343 = por %p341, %p342
      %p345 = scmp.ne.s32.totalorder %s328, %s344
      %p346 = scmp.eq.s32.totalorder %s39, 0
      %p347 = por %p345, %p346
      %p348 = scmp.le.s32.totalorder 1, %s33
      %p349 = scmp.lt.s32.totalorder %s33, 7
      %p350 = pnand %p348, %p349
      %p351 = pneg %p350
      // Predicated region
      $region9: #{tpu_custom_call.1} parent=5 // pred_check
        _
      $region10: #{tpu_custom_call.1} parent=5 // pred_check_branch
        %353 = sbr.rel (%p350) target = $region12
      $region11: #{tpu_custom_call.1} parent=5 // pred_region
        %s354 = ssub.s32 %s33, 1
        // Predicated region
        $region13: #{tpu_custom_call.1} parent=11 // pred_check
          %p355 = pneg %p200
        $region14: #{tpu_custom_call.1} parent=11 // pred_check_branch
          %357 = sbr.rel (%p355) target = $region16
        $region15: #{tpu_custom_call.1} parent=11 // pred_region
          _
        $region16: #{tpu_custom_call.1} parent=11 // pred_fallthru
          _
        // Predicated region
        $region17: #{tpu_custom_call.1} parent=11 // pred_check
          %p358 = pneg %p221
        $region18: #{tpu_custom_call.1} parent=11 // pred_check_branch
          %360 = sbr.rel (%p358) target = $region20
        $region19: #{tpu_custom_call.1} parent=11 // pred_region
          _
        $region20: #{tpu_custom_call.1} parent=11 // pred_fallthru
          _
        // Predicated region
        $region21: #{tpu_custom_call.1} parent=11 // pred_check
          %p361 = pneg %p242
        $region22: #{tpu_custom_call.1} parent=11 // pred_check_branch
          %363 = sbr.rel (%p361) target = $region24
        $region23: #{tpu_custom_call.1} parent=11 // pred_region
          %s365 = ssub.s32 512, 512
          %366 = vsyncadd [#allocation13], %s365
          %s367 = sshll.u32 [#allocation14], 4
          %s368 = int_to_ptr.vmem [resolvable:$true] %s367
          %373 = dma.hbm_to_vmem [thread:$0]  %s6, 512, %s368, [#allocation13], 128, 128, 8
        $region24: #{tpu_custom_call.1} parent=11 // pred_fallthru
          _
        // Predicated region
        $region25: #{tpu_custom_call.1} parent=11 // pred_check
          %p374 = pneg %p263
        $region26: #{tpu_custom_call.1} parent=11 // pred_check_branch
          %376 = sbr.rel (%p374) target = $region28
        $region27: #{tpu_custom_call.1} parent=11 // pred_region
          %s378 = ssub.s32 512, 512
          %379 = vsyncadd [#allocation16], %s378
          %s380 = sshll.u32 [#allocation15], 4
          %s381 = int_to_ptr.vmem [resolvable:$true] %s380
          %386 = dma.hbm_to_vmem [thread:$0]  %s7, 512, %s381, [#allocation16], 128, 128, 8
        $region28: #{tpu_custom_call.1} parent=11 // pred_fallthru
          _
        // Predicated region
        $region29: #{tpu_custom_call.1} parent=11 // pred_check
          %p387 = pneg %p284
        $region30: #{tpu_custom_call.1} parent=11 // pred_check_branch
          %389 = sbr.rel (%p387) target = $region32
        $region31: #{tpu_custom_call.1} parent=11 // pred_region
          %s391 = ssub.s32 512, 512
          %392 = vsyncadd [#allocation16], %s391
          %s393 = sshll.u32 [#allocation17], 4
          %s394 = int_to_ptr.vmem [resolvable:$true] %s393
          %399 = dma.hbm_to_vmem [thread:$0]  %s8, 512, %s394, [#allocation16], 128, 128, 8
        $region32: #{tpu_custom_call.1} parent=11 // pred_fallthru
          _
      $region12: #{tpu_custom_call.1} parent=5 // pred_fallthru
        _
      %p400 = scmp.lt.s32.totalorder %s33, 6
      // Predicated region
      $region33: #{tpu_custom_call.1} parent=5 // pred_check
        %p401 = pneg %p400
      $region34: #{tpu_custom_call.1} parent=5 // pred_check_branch
        %403 = sbr.rel (%p401) target = $region36
      $region35: #{tpu_custom_call.1} parent=5 // pred_region
        // Predicated region
        $region37: #{tpu_custom_call.1} parent=35 // pred_check
          %p404 = pneg %p81
        $region38: #{tpu_custom_call.1} parent=35 // pred_check_branch
          %406 = sbr.rel (%p404) target = $region40
        $region39: #{tpu_custom_call.1} parent=35 // pred_region
          %s407 = sand.u32 %s71, 1
          %s408 = scalar_lea.sflag [#allocation7], %s407
          %s409 = sand.u32 %s71, 1
          %s410 = smul.addr %s409, 8
          %s411 = scalar_lea.vmem [#allocation6], %s410
          %s413 = ssub.s32 128, 128
          %414 = vsyncadd %s408, %s413
          %s415 = sadd.s32 %s41, %s40
          %s416 = smul.addr %s415, 128
          %s417 = scalar_lea.hbm %s0, %s416
          %s419 = sshll.u32 %s411, 4
          %s420 = int_to_ptr.vmem [resolvable:$true] %s419
          %422 = dma.hbm_to_vmem [thread:$0]  %s417, 128, %s420, %s408
        $region40: #{tpu_custom_call.1} parent=35 // pred_fallthru
          _
        // Predicated region
        $region41: #{tpu_custom_call.1} parent=35 // pred_check
          %p423 = pneg %p109
        $region42: #{tpu_custom_call.1} parent=35 // pred_check_branch
          %425 = sbr.rel (%p423) target = $region44
        $region43: #{tpu_custom_call.1} parent=35 // pred_region
          %s426 = sand.u32 %s33, 1
          %s427 = scalar_lea.sflag [#allocation10], %s426
          %s428 = sand.u32 %s99, 1
          %s429 = smul.addr %s428, 8
          %s430 = scalar_lea.vmem [#allocation9], %s429
          %s432 = ssub.s32 128, 128
          %433 = vsyncadd %s427, %s432
          %s434 = sadd.s32 %s43, %s40
          %s435 = smul.addr %s434, 128
          %s436 = scalar_lea.hbm %s1, %s435
          %s438 = sshll.u32 %s430, 4
          %s439 = int_to_ptr.vmem [resolvable:$true] %s438
          %441 = dma.hbm_to_vmem [thread:$0]  %s436, 128, %s439, %s427
        $region44: #{tpu_custom_call.1} parent=35 // pred_fallthru
          _
        // Predicated region
        $region45: #{tpu_custom_call.1} parent=35 // pred_check
          %p442 = pneg %p143
        $region46: #{tpu_custom_call.1} parent=35 // pred_check_branch
          %444 = sbr.rel (%p442) target = $region48
        $region47: #{tpu_custom_call.1} parent=35 // pred_region
          %s445 = sand.u32 %s33, 1
          %s446 = scalar_lea.sflag [#allocation10], %s445
          %s447 = sand.u32 %s133, 1
          %s448 = smul.addr %s447, 8
          %s449 = scalar_lea.vmem [#allocation11], %s448
          %p450 = scmp.lt.s32.totalorder %s42, 1
          %s451 = scalar_select %p450, %s42, 1
          %s453 = ssub.s32 128, 128
          %454 = vsyncadd %s446, %s453
          %s455 = sadd.s32 %s43, %s40
          %s456 = smul.addr %s451, 2
          %s457 = sadd.s32 %s455, %s456
          %s458 = smul.addr %s457, 128
          %s459 = scalar_lea.hbm %s2, %s458
          %s461 = sshll.u32 %s449, 4
          %s462 = int_to_ptr.vmem [resolvable:$true] %s461
          %464 = dma.hbm_to_vmem [thread:$0]  %s459, 128, %s462, %s446
        $region48: #{tpu_custom_call.1} parent=35 // pred_fallthru
          _
        // Predicated region
        $region49: #{tpu_custom_call.1} parent=35 // pred_check
          %p465 = pneg %p173
        $region50: #{tpu_custom_call.1} parent=35 // pred_check_branch
          %467 = sbr.rel (%p465) target = $region52
        $region51: #{tpu_custom_call.1} parent=35 // pred_region
          %s468 = sand.u32 %s33, 1
          %s469 = scalar_lea.sflag [#allocation13], %s468
          %s470 = sand.u32 %s163, 1
          %s471 = smul.addr %s470, 8
          %s472 = scalar_lea.vmem [#allocation12], %s471
          %s474 = ssub.s32 128, 128
          %475 = vsyncadd %s469, %s474
          %s476 = sadd.s32 %s43, %s41
          %s477 = sadd.s32 %s476, %s40
          %s478 = smul.addr %s477, 128
          %s479 = scalar_lea.hbm %s3, %s478
          %s481 = sshll.u32 %s472, 4
          %s482 = int_to_ptr.vmem [resolvable:$true] %s481
          %484 = dma.hbm_to_vmem [thread:$0]  %s479, 128, %s482, %s469
        $region52: #{tpu_custom_call.1} parent=35 // pred_fallthru
          _
      $region36: #{tpu_custom_call.1} parent=5 // pred_fallthru
        _
      %p485 = scmp.le.s32.totalorder 1, %s33
      %p486 = scmp.lt.s32.totalorder %s33, 7
      %p487 = pnand %p485, %p486
      %p488 = pneg %p487
      // Predicated region
      $region53: #{tpu_custom_call.1} parent=5 // pred_check
        _
      $region54: #{tpu_custom_call.1} parent=5 // pred_check_branch
        %490 = sbr.rel (%p487) target = $region56
      $region55: #{tpu_custom_call.1} parent=5 // pred_region
        %s491 = ssub.s32 %s33, 1
        %s492 = sand.u32 %s74, 1
        %s493 = scalar_lea.sflag [#allocation7], %s492
        %s494 = sand.u32 %s74, 1
        %s495 = smul.addr %s494, 8
        %s496 = scalar_lea.vmem [#allocation6], %s495
        // Predicated region
        $region57: #{tpu_custom_call.1} parent=55 // pred_check
          %p497 = pneg %p87
        $region58: #{tpu_custom_call.1} parent=55 // pred_check_branch
          %499 = sbr.rel (%p497) target = $region60
        $region59: #{tpu_custom_call.1} parent=55 // pred_region
          %500 = dma.done %s493, 128
        $region60: #{tpu_custom_call.1} parent=55 // pred_fallthru
          _
        %s501 = sand.u32 %s38, 1
        %s502 = scalar_lea.sflag [#allocation10], %s501
        %s503 = sand.u32 %s102, 1
        %s504 = smul.addr %s503, 8
        %s505 = scalar_lea.vmem [#allocation9], %s504
        // Predicated region
        $region61: #{tpu_custom_call.1} parent=55 // pred_check
          %p506 = pneg %p115
        $region62: #{tpu_custom_call.1} parent=55 // pred_check_branch
          %508 = sbr.rel (%p506) target = $region64
        $region63: #{tpu_custom_call.1} parent=55 // pred_region
          %509 = dma.done %s502, 128
        $region64: #{tpu_custom_call.1} parent=55 // pred_fallthru
          _
        %s510 = sand.u32 %s38, 1
        %s511 = scalar_lea.sflag [#allocation10], %s510
        %s512 = sand.u32 %s136, 1
        %s513 = smul.addr %s512, 8
        %s514 = scalar_lea.vmem [#allocation11], %s513
        // Predicated region
        $region65: #{tpu_custom_call.1} parent=55 // pred_check
          %p515 = pneg %p149
        $region66: #{tpu_custom_call.1} parent=55 // pred_check_branch
          %517 = sbr.rel (%p515) target = $region68
        $region67: #{tpu_custom_call.1} parent=55 // pred_region
          %518 = dma.done %s511, 128
        $region68: #{tpu_custom_call.1} parent=55 // pred_fallthru
          _
        %s519 = sand.u32 %s38, 1
        %s520 = scalar_lea.sflag [#allocation13], %s519
        %s521 = sand.u32 %s166, 1
        %s522 = smul.addr %s521, 8
        %s523 = scalar_lea.vmem [#allocation12], %s522
        // Predicated region
        $region69: #{tpu_custom_call.1} parent=55 // pred_check
          %p524 = pneg %p179
        $region70: #{tpu_custom_call.1} parent=55 // pred_check_branch
          %526 = sbr.rel (%p524) target = $region72
        $region71: #{tpu_custom_call.1} parent=55 // pred_region
          %527 = dma.done %s520, 128
        $region72: #{tpu_custom_call.1} parent=55 // pred_fallthru
          _
        // Predicated region
        $region73: #{tpu_custom_call.1} parent=55 // pred_check
          %p528 = pneg %p242
        $region74: #{tpu_custom_call.1} parent=55 // pred_check_branch
          %530 = sbr.rel (%p528) target = $region76
        $region75: #{tpu_custom_call.1} parent=55 // pred_region
          %531 = dma.done [#allocation13], 512
        $region76: #{tpu_custom_call.1} parent=55 // pred_fallthru
          _
        // Predicated region
        $region77: #{tpu_custom_call.1} parent=55 // pred_check
          %p532 = pneg %p263
        $region78: #{tpu_custom_call.1} parent=55 // pred_check_branch
          %534 = sbr.rel (%p532) target = $region80
        $region79: #{tpu_custom_call.1} parent=55 // pred_region
          %535 = dma.done [#allocation16], 512
        $region80: #{tpu_custom_call.1} parent=55 // pred_fallthru
          _
        // Predicated region
        $region81: #{tpu_custom_call.1} parent=55 // pred_check
          %p536 = pneg %p284
        $region82: #{tpu_custom_call.1} parent=55 // pred_check_branch
          %538 = sbr.rel (%p536) target = $region84
        $region83: #{tpu_custom_call.1} parent=55 // pred_region
          %539 = dma.done [#allocation16], 512
        $region84: #{tpu_custom_call.1} parent=55 // pred_fallthru
          _
        %s540 = sand.u32 %s74, 1
        %s541 = scalar_lea.sflag [#allocation7], %s540
        %s542 = sand.u32 %s74, 1
        %s543 = smul.addr %s542, 8
        %s544 = scalar_lea.vmem [#allocation6], %s543
        %p545 = pneg %p87
        %p546 = pneg %p84
        %s547 = sand.u32 %s38, 1
        %s548 = scalar_lea.sflag [#allocation10], %s547
        %s549 = sand.u32 %s102, 1
        %s550 = smul.addr %s549, 8
        %s551 = scalar_lea.vmem [#allocation9], %s550
        %p552 = pneg %p115
        %p553 = pneg %p112
        %s554 = sand.u32 %s38, 1
        %s555 = scalar_lea.sflag [#allocation10], %s554
        %s556 = sand.u32 %s136, 1
        %s557 = smul.addr %s556, 8
        %s558 = scalar_lea.vmem [#allocation11], %s557
        %p559 = pneg %p149
        %p560 = pneg %p146
        %s561 = sand.u32 %s38, 1
        %s562 = scalar_lea.sflag [#allocation13], %s561
        %s563 = sand.u32 %s166, 1
        %s564 = smul.addr %s563, 8
        %s565 = scalar_lea.vmem [#allocation12], %s564
        %p566 = pneg %p179
        %p567 = pneg %p176
        %p568 = pneg %p200
        %p569 = pneg %p197
        %p570 = pneg %p221
        %p571 = pneg %p218
        %p572 = pneg %p242
        %p573 = pneg %p239
        %p574 = pneg %p263
        %p575 = pneg %p260
        %p576 = pneg %p284
        %p577 = pneg %p281
        %p578 = pneg %p312
        %p579 = pneg %p309
        %s580 = sand.u32 %s299, 1
        %s581 = scalar_lea.sflag [#allocation8], %s580
        %s582 = sand.u32 %s299, 1
        %s583 = smul.addr %s582, 8
        %s584 = scalar_lea.vmem [#allocation18], %s583
        %p585 = pneg %p340
        %p586 = pneg %p337
        %s587 = sand.u32 %s327, 1
        %s588 = scalar_lea.sflag [#allocation20], %s587
        %s589 = sand.u32 %s327, 1
        %s590 = smul.addr %s589, 8
        %s591 = scalar_lea.vmem [#allocation19], %s590
        %p592 = scmp.lt.s32.totalorder %s46, 1
        %s593 = scalar_select %p592, %s46, 1
        %v594 = vld [vmem:[%s4] sm:$0x1]
        %v595 = vld [vmem:[%s5] sm:$0x1]
        %p596 = scmp.eq.s32.totalorder %s46, 0
        %p597 = scmp.eq.s32.totalorder %s47, 0
        %p598 = pnand %p596, %p597
        %p599 = pneg %p598
        // Predicated region
        $region85: #{tpu_custom_call.1} parent=55 // pred_check
          _
        $region86: #{tpu_custom_call.1} parent=55 // pred_check_branch
          %601 = sbr.rel (%p598) target = $region88
        $region87: #{tpu_custom_call.1} parent=55 // pred_region
          %v602 = vld [vmem:[%s496] sm:$0xff]
          %vm603 = vcmask 261120
          %v604 = vsel %vm603, %v602, 0.0
          %605 = vadd.xlane.f32.xlu0 %v604
          %v606 = vpop.xlane.xlu0 %605
          %v607 = vrcp.pop 32.0
          %v608 = vmul.f32 %v606, %v607
          %v609 = vsub.f32 %v602, %v608
          %v610 = vmul.f32 %v609, %v609
          %v611 = vsel %vm603, %v610, 0.0
          %612 = vadd.xlane.f32.xlu0 %v611
          %v613 = vpop.xlane.xlu0 %612
          %v614 = vmul.f32 %v613, %v607
          %v615 = vadd.f32 %v614, 1e-06
          %v616 = vrsqrt.pop %v615
          %v617 = vmul.f32 %v609, %v616
          %v619 = vlaneseq
          %v620 = vshrl.u32 %v619, 7
          %v621 = vsub.s32 0, %v620
          %v622 = vrot.slane %v594, %v621
          %v624 = vmul.f32 %v617, %v622
          %v626 = vlaneseq
          %v627 = vshrl.u32 %v626, 7
          %v628 = vsub.s32 0, %v627
          %v629 = vrot.slane %v595, %v628
          %v631 = vadd.f32 %v624, %v629
          %v632 = vld [vmem:[#allocation14] sm:$0xff]
          %v633 = vld [vmem:[#allocation14 + $0x8] sm:$0xff]
          %v634 = vld [vmem:[#allocation14 + $0x10] sm:$0xff]
          %v635 = vld [vmem:[#allocation14 + $0x18] sm:$0xff]
          %v637 = vsel %vm603, %v631, 0
          %639 = vmatprep.subr.mxu0 0.0
          %640 = vmatpush1.msra.mxu0 0.0
          %641 = vmatprep.subr.mxu0 0.0
          %642 = vmatpush1.msra.mxu0 0.0
          %643 = vmatprep.subr.mxu0 0.0
          %644 = vmatpush1.msra.mxu0 0.0
          %645 = vmatprep.subr.mxu0 0.0
          %646 = vmatpush1.msra.mxu0 0.0
          %647 = vmatprep.subr.mxu0 0.0
          %648 = vmatpush1.msra.mxu0 0.0
          %649 = vmatprep.subr.mxu0 0.0
          %650 = vmatpush1.msra.mxu0 0.0
          %651 = vmatprep.subr.mxu0 0.0
          %652 = vmatpush1.msra.mxu0 0.0
          %653 = vmatprep.subr.mxu0 0.0
          %654 = vmatpush1.msra.mxu0 0.0
          %655 = vmatprep.subr.mxu0 0.0
          %656 = vmatpush1.msra.mxu0 0.0
          %657 = vmatprep.subr.mxu0 0.0
          %658 = vmatpush1.msra.mxu0 0.0
          %659 = vmatprep.subr.mxu0 0.0
          %660 = vmatpush1.msra.mxu0 0.0
          %661 = vmatprep.subr.mxu0 0.0
          %662 = vmatpush1.msra.mxu0 0.0
          %663 = vmatprep.subr.mxu0 0.0
          %664 = vmatpush1.msra.mxu0 %v635
          %665 = vmatprep.subr.mxu0 0.0
          %666 = vmatpush1.msra.mxu0 %v634
          %667 = vmatprep.subr.mxu0 0.0
          %668 = vmatpush1.msra.mxu0 %v633
          %669 = vmatprep.subr.mxu0 0.0
          %670 = vmatpush1.msra.mxu0 %v632
          %671 = vmatprep.subr.mxu0 0.0
          %672 = vmatpush2.msra.mxu0 0.0
          %673 = vmatprep.subr.mxu0 0.0
          %674 = vmatpush2.msra.mxu0 0.0
          %675 = vmatprep.subr.mxu0 0.0
          %676 = vmatpush2.msra.mxu0 0.0
          %677 = vmatprep.subr.mxu0 0.0
          %678 = vmatpush2.msra.mxu0 0.0
          %679 = vmatprep.subr.mxu0 0.0
          %680 = vmatpush2.msra.mxu0 0.0
          %681 = vmatprep.subr.mxu0 0.0
          %682 = vmatpush2.msra.mxu0 0.0
          %683 = vmatprep.subr.mxu0 0.0
          %684 = vmatpush2.msra.mxu0 0.0
          %685 = vmatprep.subr.mxu0 0.0
          %686 = vmatpush2.msra.mxu0 0.0
          %687 = vmatprep.subr.mxu0 0.0
          %688 = vmatpush2.msra.mxu0 0.0
          %689 = vmatprep.subr.mxu0 0.0
          %690 = vmatpush2.msra.mxu0 0.0
          %691 = vmatprep.subr.mxu0 0.0
          %692 = vmatpush2.msra.mxu0 0.0
          %693 = vmatprep.subr.mxu0 0.0
          %694 = vmatpush2.msra.mxu0 0.0
          %695 = vmatprep.subr.mxu0 0.0
          %696 = vmatpush2.msra.mxu0 0.0
          %697 = vmatprep.subr.mxu0 0.0
          %698 = vmatpush2.msra.mxu0 0.0
          %699 = vmatprep.subr.mxu0 0.0
          %700 = vmatpush2.msra.mxu0 0.0
          %701 = vmatprep.subr.mxu0 0.0
          %702 = vmatpush2.msra.mxu0 0.0
          %703 = vmatprep.mubr.f32.mxu0 0.0
          %704 = vmatmul.mubr.f32.gmra.mxu0 %v637
          %v705 = vpop.f32.mrf.mxu0
          %v706 = vadd.f32 0.0, %v705
          %v707 = vpop.f32.mrf.mxu0
          %708 = vdwg.mxu0
          %v709 = vmul.f32 %v706, 0.35355338
          %710 = vst.msk [vmem:[#allocation2] sm:$0xff] %vm603, %v709
          %vm711 = vcmask 31744
          %712 = vst.msk [vmem:[#allocation3] sm:$0xff] %vm711, -1e+30
          %713 = vst.msk [vmem:[#allocation4] sm:$0xff] %vm711, 0.0
          %714 = vst.msk [vmem:[#allocation5] sm:$0xff] %vm603, 0.0
        $region88: #{tpu_custom_call.1} parent=55 // pred_fallthru
          _
        %p715 = scmp.eq.s32.totalorder %s46, 2
        %v716 = vld [vmem:[%s505] sm:$0xff]
        %vm717 = vcmask 261120
        %v718 = vsel %vm717, %v716, 0.0
        %719 = vadd.xlane.f32.xlu0 %v718
        %v720 = vpop.xlane.xlu0 %719
        %v721 = vrcp.pop 32.0
        %v722 = vmul.f32 %v720, %v721
        %v723 = vsub.f32 %v716, %v722
        %v724 = vmul.f32 %v723, %v723
        %v725 = vsel %vm717, %v724, 0.0
        %726 = vadd.xlane.f32.xlu0 %v725
        %v727 = vpop.xlane.xlu0 %726
        %v728 = vmul.f32 %v727, %v721
        %v729 = vadd.f32 %v728, 1e-06
        %v730 = vrsqrt.pop %v729
        %v731 = vmul.f32 %v723, %v730
        %v733 = vlaneseq
        %v734 = vshrl.u32 %v733, 7
        %v735 = vsub.s32 0, %v734
        %v736 = vrot.slane %v594, %v735
        %v738 = vmul.f32 %v731, %v736
        %v740 = vlaneseq
        %v741 = vshrl.u32 %v740, 7
        %v742 = vsub.s32 0, %v741
        %v743 = vrot.slane %v595, %v742
        %v745 = vadd.f32 %v738, %v743
        %v746 = vld [vmem:[%s514] sm:$0xff]
        %s747 = scalar_select %p715, 1, 0
        %v748 = vstv %s747
        %vm749 = vcmp.eq.s32.totalorder %v748, 1
        %v750 = vsel %vm749, %v745, %v746
        %v751 = vld [vmem:[#allocation15] sm:$0xff]
        %v752 = vld [vmem:[#allocation15 + $0x8] sm:$0xff]
        %v753 = vld [vmem:[#allocation15 + $0x10] sm:$0xff]
        %v754 = vld [vmem:[#allocation15 + $0x18] sm:$0xff]
        %v756 = vsel %vm717, %v750, 0
        %758 = vmatprep.subr.mxu0 0.0
        %759 = vmatpush1.msra.mxu0 0.0
        %760 = vmatprep.subr.mxu0 0.0
        %761 = vmatpush1.msra.mxu0 0.0
        %762 = vmatprep.subr.mxu0 0.0
        %763 = vmatpush1.msra.mxu0 0.0
        %764 = vmatprep.subr.mxu0 0.0
        %765 = vmatpush1.msra.mxu0 0.0
        %766 = vmatprep.subr.mxu0 0.0
        %767 = vmatpush1.msra.mxu0 0.0
        %768 = vmatprep.subr.mxu0 0.0
        %769 = vmatpush1.msra.mxu0 0.0
        %770 = vmatprep.subr.mxu0 0.0
        %771 = vmatpush1.msra.mxu0 0.0
        %772 = vmatprep.subr.mxu0 0.0
        %773 = vmatpush1.msra.mxu0 0.0
        %774 = vmatprep.subr.mxu0 0.0
        %775 = vmatpush1.msra.mxu0 0.0
        %776 = vmatprep.subr.mxu0 0.0
        %777 = vmatpush1.msra.mxu0 0.0
        %778 = vmatprep.subr.mxu0 0.0
        %779 = vmatpush1.msra.mxu0 0.0
        %780 = vmatprep.subr.mxu0 0.0
        %781 = vmatpush1.msra.mxu0 0.0
        %782 = vmatprep.subr.mxu0 0.0
        %783 = vmatpush1.msra.mxu0 %v754
        %784 = vmatprep.subr.mxu0 0.0
        %785 = vmatpush1.msra.mxu0 %v753
        %786 = vmatprep.subr.mxu0 0.0
        %787 = vmatpush1.msra.mxu0 %v752
        %788 = vmatprep.subr.mxu0 0.0
        %789 = vmatpush1.msra.mxu0 %v751
        %790 = vmatprep.subr.mxu0 0.0
        %791 = vmatpush2.msra.mxu0 0.0
        %792 = vmatprep.subr.mxu0 0.0
        %793 = vmatpush2.msra.mxu0 0.0
        %794 = vmatprep.subr.mxu0 0.0
        %795 = vmatpush2.msra.mxu0 0.0
        %796 = vmatprep.subr.mxu0 0.0
        %797 = vmatpush2.msra.mxu0 0.0
        %798 = vmatprep.subr.mxu0 0.0
        %799 = vmatpush2.msra.mxu0 0.0
        %800 = vmatprep.subr.mxu0 0.0
        %801 = vmatpush2.msra.mxu0 0.0
        %802 = vmatprep.subr.mxu0 0.0
        %803 = vmatpush2.msra.mxu0 0.0
        %804 = vmatprep.subr.mxu0 0.0
        %805 = vmatpush2.msra.mxu0 0.0
        %806 = vmatprep.subr.mxu0 0.0
        %807 = vmatpush2.msra.mxu0 0.0
        %808 = vmatprep.subr.mxu0 0.0
        %809 = vmatpush2.msra.mxu0 0.0
        %810 = vmatprep.subr.mxu0 0.0
        %811 = vmatpush2.msra.mxu0 0.0
        %812 = vmatprep.subr.mxu0 0.0
        %813 = vmatpush2.msra.mxu0 0.0
        %814 = vmatprep.subr.mxu0 0.0
        %815 = vmatpush2.msra.mxu0 0.0
        %816 = vmatprep.subr.mxu0 0.0
        %817 = vmatpush2.msra.mxu0 0.0
        %818 = vmatprep.subr.mxu0 0.0
        %819 = vmatpush2.msra.mxu0 0.0
        %820 = vmatprep.subr.mxu0 0.0
        %821 = vmatpush2.msra.mxu0 0.0
        %822 = vmatprep.mubr.f32.mxu0 0.0
        %823 = vmatmul.mubr.f32.gmra.mxu0 %v756
        %v824 = vpop.f32.mrf.mxu0
        %v825 = vadd.f32 0.0, %v824
        %v826 = vpop.f32.mrf.mxu0
        %827 = vdwg.mxu0
        %v828 = vld [vmem:[%s523] sm:$0xff]
        %v829 = vld [vmem:[#allocation2] sm:$0xff]
        %vm830 = vcmask 64512
        %v832 = vsel %vm830, %v829, 0
        %v835 = vsel %vm830, %v825, 0
        %837 = vmatprep.subr.mxu0 0.0
        %838 = vmatpush1.xpose.msra.mxu0 0.0
        %839 = vmatprep.subr.mxu0 0.0
        %840 = vmatpush1.xpose.msra.mxu0 0.0
        %841 = vmatprep.subr.mxu0 0.0
        %842 = vmatpush1.xpose.msra.mxu0 0.0
        %843 = vmatprep.subr.mxu0 0.0
        %844 = vmatpush1.xpose.msra.mxu0 0.0
        %845 = vmatprep.subr.mxu0 0.0
        %846 = vmatpush1.xpose.msra.mxu0 0.0
        %847 = vmatprep.subr.mxu0 0.0
        %848 = vmatpush1.xpose.msra.mxu0 0.0
        %849 = vmatprep.subr.mxu0 0.0
        %850 = vmatpush1.xpose.msra.mxu0 0.0
        %851 = vmatprep.subr.mxu0 0.0
        %852 = vmatpush1.xpose.msra.mxu0 0.0
        %853 = vmatprep.subr.mxu0 0.0
        %854 = vmatpush1.xpose.msra.mxu0 0.0
        %855 = vmatprep.subr.mxu0 0.0
        %856 = vmatpush1.xpose.msra.mxu0 0.0
        %857 = vmatprep.subr.mxu0 0.0
        %858 = vmatpush1.xpose.msra.mxu0 0.0
        %859 = vmatprep.subr.mxu0 0.0
        %860 = vmatpush1.xpose.msra.mxu0 0.0
        %861 = vmatprep.subr.mxu0 0.0
        %862 = vmatpush1.xpose.msra.mxu0 0.0
        %863 = vmatprep.subr.mxu0 0.0
        %864 = vmatpush1.xpose.msra.mxu0 0.0
        %865 = vmatprep.subr.mxu0 0.0
        %866 = vmatpush1.xpose.msra.mxu0 0.0
        %867 = vmatprep.subr.mxu0 0.0
        %868 = vmatpush1.xpose.msra.mxu0 %v835
        %869 = vmatprep.subr.mxu0 0.0
        %870 = vmatpush2.xpose.msra.mxu0 0.0
        %871 = vmatprep.subr.mxu0 0.0
        %872 = vmatpush2.xpose.msra.mxu0 0.0
        %873 = vmatprep.subr.mxu0 0.0
        %874 = vmatpush2.xpose.msra.mxu0 0.0
        %875 = vmatprep.subr.mxu0 0.0
        %876 = vmatpush2.xpose.msra.mxu0 0.0
        %877 = vmatprep.subr.mxu0 0.0
        %878 = vmatpush2.xpose.msra.mxu0 0.0
        %879 = vmatprep.subr.mxu0 0.0
        %880 = vmatpush2.xpose.msra.mxu0 0.0
        %881 = vmatprep.subr.mxu0 0.0
        %882 = vmatpush2.xpose.msra.mxu0 0.0
        %883 = vmatprep.subr.mxu0 0.0
        %884 = vmatpush2.xpose.msra.mxu0 0.0
        %885 = vmatprep.subr.mxu0 0.0
        %886 = vmatpush2.xpose.msra.mxu0 0.0
        %887 = vmatprep.subr.mxu0 0.0
        %888 = vmatpush2.xpose.msra.mxu0 0.0
        %889 = vmatprep.subr.mxu0 0.0
        %890 = vmatpush2.xpose.msra.mxu0 0.0
        %891 = vmatprep.subr.mxu0 0.0
        %892 = vmatpush2.xpose.msra.mxu0 0.0
        %893 = vmatprep.subr.mxu0 0.0
        %894 = vmatpush2.xpose.msra.mxu0 0.0
        %895 = vmatprep.subr.mxu0 0.0
        %896 = vmatpush2.xpose.msra.mxu0 0.0
        %897 = vmatprep.subr.mxu0 0.0
        %898 = vmatpush2.xpose.msra.mxu0 0.0
        %899 = vmatprep.subr.mxu0 0.0
        %900 = vmatpush2.xpose.msra.mxu0 0.0
        %901 = vmatprep.mubr.f32.mxu0 0.0
        %902 = vmatmul.mubr.f32.gmra.mxu0 %v832
        %v903 = vpop.f32.mrf.mxu0
        %v904 = vadd.f32 0.0, %v903
        %v905 = vpop.f32.mrf.mxu0
        %906 = vdwg.mxu0
        %vm907 = vcmp.gt.f32.partialorder %v828, 0.5
        %v908 = vsel %vm907, -1e+30, %v904
        %v909 = vld [vmem:[#allocation3] sm:$0xff]
        %v910 = vsel %vm830, %v908, -inf
        %911 = vmax.xlane.f32.xlu0 %v910
        %v912 = vpop.xlane.xlu0 %911
        %v913 = vmax.f32 %v909, %v912
        %v914 = vsub.f32 %v909, %v913
        %v915 = vmul.f32 %v914, 1.442695
        %v916 = vpow.pop %v915
        %918 = vset.pattern.permute.xlu0 0
        %919 = vperm.xlu0 %918, %v913
        %v920 = vpop.permute.xlu0 %919
        %v922 = vsub.f32 %v908, %v920
        %v923 = vmul.f32 %v922, 1.442695
        %v924 = vpow.pop %v923
        %v925 = vld [vmem:[#allocation4] sm:$0xff]
        %v926 = vmul.f32 %v916, %v925
        %v927 = vsel %vm830, %v924, 0.0
        %928 = vadd.xlane.f32.xlu0 %v927
        %v929 = vpop.xlane.xlu0 %928
        %v930 = vadd.f32 %v926, %v929
        %vm931 = vcmask 7168
        %932 = vst.msk [vmem:[#allocation4] sm:$0xff] %vm931, %v930
        %v933 = vld [vmem:[#allocation5] sm:$0xff]
        %935 = vset.pattern.permute.xlu0 0
        %936 = vperm.xlu0 %935, %v916
        %v937 = vpop.permute.xlu0 %936
        %v939 = vmul.f32 %v937, %v933
        %940 = vrot.lane.b32.xlu0 %v825, 96
        %v941 = vpop.permute.xlu0 %940
        %v944 = vsel %vm830, %v924, 0
        %946 = vmatprep.subr.mxu0 0.0
        %947 = vmatpush1.msra.mxu0 0.0
        %948 = vmatprep.subr.mxu0 0.0
        %949 = vmatpush1.msra.mxu0 0.0
        %950 = vmatprep.subr.mxu0 0.0
        %951 = vmatpush1.msra.mxu0 0.0
        %952 = vmatprep.subr.mxu0 0.0
        %953 = vmatpush1.msra.mxu0 0.0
        %954 = vmatprep.subr.mxu0 0.0
        %955 = vmatpush1.msra.mxu0 0.0
        %956 = vmatprep.subr.mxu0 0.0
        %957 = vmatpush1.msra.mxu0 0.0
        %958 = vmatprep.subr.mxu0 0.0
        %959 = vmatpush1.msra.mxu0 0.0
        %960 = vmatprep.subr.mxu0 0.0
        %961 = vmatpush1.msra.mxu0 0.0
        %962 = vmatprep.subr.mxu0 0.0
        %963 = vmatpush1.msra.mxu0 0.0
        %964 = vmatprep.subr.mxu0 0.0
        %965 = vmatpush1.msra.mxu0 0.0
        %966 = vmatprep.subr.mxu0 0.0
        %967 = vmatpush1.msra.mxu0 0.0
        %968 = vmatprep.subr.mxu0 0.0
        %969 = vmatpush1.msra.mxu0 0.0
        %970 = vmatprep.subr.mxu0 0.0
        %971 = vmatpush1.msra.mxu0 0.0
        %972 = vmatprep.subr.mxu0 0.0
        %973 = vmatpush1.msra.mxu0 0.0
        %974 = vmatprep.subr.mxu0 0.0
        %975 = vmatpush1.msra.mxu0 0.0
        %976 = vmatprep.subr.mxu0 0.0
        %977 = vmatpush1.msra.mxu0 %v941
        %978 = vmatprep.subr.mxu0 0.0
        %979 = vmatpush2.msra.mxu0 0.0
        %980 = vmatprep.subr.mxu0 0.0
        %981 = vmatpush2.msra.mxu0 0.0
        %982 = vmatprep.subr.mxu0 0.0
        %983 = vmatpush2.msra.mxu0 0.0
        %984 = vmatprep.subr.mxu0 0.0
        %985 = vmatpush2.msra.mxu0 0.0
        %986 = vmatprep.subr.mxu0 0.0
        %987 = vmatpush2.msra.mxu0 0.0
        %988 = vmatprep.subr.mxu0 0.0
        %989 = vmatpush2.msra.mxu0 0.0
        %990 = vmatprep.subr.mxu0 0.0
        %991 = vmatpush2.msra.mxu0 0.0
        %992 = vmatprep.subr.mxu0 0.0
        %993 = vmatpush2.msra.mxu0 0.0
        %994 = vmatprep.subr.mxu0 0.0
        %995 = vmatpush2.msra.mxu0 0.0
        %996 = vmatprep.subr.mxu0 0.0
        %997 = vmatpush2.msra.mxu0 0.0
        %998 = vmatprep.subr.mxu0 0.0
        %999 = vmatpush2.msra.mxu0 0.0
        %1000 = vmatprep.subr.mxu0 0.0
        %1001 = vmatpush2.msra.mxu0 0.0
        %1002 = vmatprep.subr.mxu0 0.0
        %1003 = vmatpush2.msra.mxu0 0.0
        %1004 = vmatprep.subr.mxu0 0.0
        %1005 = vmatpush2.msra.mxu0 0.0
        %1006 = vmatprep.subr.mxu0 0.0
        %1007 = vmatpush2.msra.mxu0 0.0
        %1008 = vmatprep.subr.mxu0 0.0
        %1009 = vmatpush2.msra.mxu0 0.0
        %1010 = vmatprep.mubr.f32.mxu0 0.0
        %1011 = vmatmul.mubr.f32.gmra.mxu0 %v944
        %v1012 = vpop.f32.mrf.mxu0
        %v1013 = vadd.f32 0.0, %v1012
        %v1014 = vpop.f32.mrf.mxu0
        %1015 = vdwg.mxu0
        %v1016 = vadd.f32 %v939, %v1013
        %1017 = vst.msk [vmem:[#allocation5] sm:$0xff] %vm830, %v1016
        %1018 = vst.msk [vmem:[#allocation3] sm:$0xff] %vm931, %v913
        %v1019 = vld [vmem:[#allocation2] sm:$0xff]
        %1021 = vrot.lane.b32.xlu0 %v1019, 120
        %v1022 = vpop.permute.xlu0 %1021
        %1023 = vrot.lane.b32.xlu0 %v825, 120
        %v1024 = vpop.permute.xlu0 %1023
        %v1025 = vsel %vm830, %v1022, 0
        %v1027 = vsel %vm830, %v1024, 0
        %1029 = vmatprep.subr.mxu0 0.0
        %1030 = vmatpush1.xpose.msra.mxu0 0.0
        %1031 = vmatprep.subr.mxu0 0.0
        %1032 = vmatpush1.xpose.msra.mxu0 0.0
        %1033 = vmatprep.subr.mxu0 0.0
        %1034 = vmatpush1.xpose.msra.mxu0 0.0
        %1035 = vmatprep.subr.mxu0 0.0
        %1036 = vmatpush1.xpose.msra.mxu0 0.0
        %1037 = vmatprep.subr.mxu0 0.0
        %1038 = vmatpush1.xpose.msra.mxu0 0.0
        %1039 = vmatprep.subr.mxu0 0.0
        %1040 = vmatpush1.xpose.msra.mxu0 0.0
        %1041 = vmatprep.subr.mxu0 0.0
        %1042 = vmatpush1.xpose.msra.mxu0 0.0
        %1043 = vmatprep.subr.mxu0 0.0
        %1044 = vmatpush1.xpose.msra.mxu0 0.0
        %1045 = vmatprep.subr.mxu0 0.0
        %1046 = vmatpush1.xpose.msra.mxu0 0.0
        %1047 = vmatprep.subr.mxu0 0.0
        %1048 = vmatpush1.xpose.msra.mxu0 0.0
        %1049 = vmatprep.subr.mxu0 0.0
        %1050 = vmatpush1.xpose.msra.mxu0 0.0
        %1051 = vmatprep.subr.mxu0 0.0
        %1052 = vmatpush1.xpose.msra.mxu0 0.0
        %1053 = vmatprep.subr.mxu0 0.0
        %1054 = vmatpush1.xpose.msra.mxu0 0.0
        %1055 = vmatprep.subr.mxu0 0.0
        %1056 = vmatpush1.xpose.msra.mxu0 0.0
        %1057 = vmatprep.subr.mxu0 0.0
        %1058 = vmatpush1.xpose.msra.mxu0 0.0
        %1059 = vmatprep.subr.mxu0 0.0
        %1060 = vmatpush1.xpose.msra.mxu0 %v1027
        %1061 = vmatprep.subr.mxu0 0.0
        %1062 = vmatpush2.xpose.msra.mxu0 0.0
        %1063 = vmatprep.subr.mxu0 0.0
        %1064 = vmatpush2.xpose.msra.mxu0 0.0
        %1065 = vmatprep.subr.mxu0 0.0
        %1066 = vmatpush2.xpose.msra.mxu0 0.0
        %1067 = vmatprep.subr.mxu0 0.0
        %1068 = vmatpush2.xpose.msra.mxu0 0.0
        %1069 = vmatprep.subr.mxu0 0.0
        %1070 = vmatpush2.xpose.msra.mxu0 0.0
        %1071 = vmatprep.subr.mxu0 0.0
        %1072 = vmatpush2.xpose.msra.mxu0 0.0
        %1073 = vmatprep.subr.mxu0 0.0
        %1074 = vmatpush2.xpose.msra.mxu0 0.0
        %1075 = vmatprep.subr.mxu0 0.0
        %1076 = vmatpush2.xpose.msra.mxu0 0.0
        %1077 = vmatprep.subr.mxu0 0.0
        %1078 = vmatpush2.xpose.msra.mxu0 0.0
        %1079 = vmatprep.subr.mxu0 0.0
        %1080 = vmatpush2.xpose.msra.mxu0 0.0
        %1081 = vmatprep.subr.mxu0 0.0
        %1082 = vmatpush2.xpose.msra.mxu0 0.0
        %1083 = vmatprep.subr.mxu0 0.0
        %1084 = vmatpush2.xpose.msra.mxu0 0.0
        %1085 = vmatprep.subr.mxu0 0.0
        %1086 = vmatpush2.xpose.msra.mxu0 0.0
        %1087 = vmatprep.subr.mxu0 0.0
        %1088 = vmatpush2.xpose.msra.mxu0 0.0
        %1089 = vmatprep.subr.mxu0 0.0
        %1090 = vmatpush2.xpose.msra.mxu0 0.0
        %1091 = vmatprep.subr.mxu0 0.0
        %1092 = vmatpush2.xpose.msra.mxu0 0.0
        %1093 = vmatprep.mubr.f32.mxu0 0.0
        %1094 = vmatmul.mubr.f32.gmra.mxu0 %v1025
        %v1095 = vpop.f32.mrf.mxu0
        %v1096 = vadd.f32 0.0, %v1095
        %v1097 = vpop.f32.mrf.mxu0
        %1098 = vdwg.mxu0
        %v1099 = vsel %vm907, -1e+30, %v1096
        %v1100 = vld [vmem:[#allocation3] sm:$0xff]
        %v1101 = vsel %vm830, %v1099, -inf
        %1102 = vmax.xlane.f32.xlu0 %v1101
        %v1103 = vpop.xlane.xlu0 %1102
        %v1104 = vmax.f32 %v1100, %v1103
        %v1105 = vsub.f32 %v1100, %v1104
        %v1106 = vmul.f32 %v1105, 1.442695
        %v1107 = vpow.pop %v1106
        %1109 = vset.pattern.permute.xlu0 1
        %1110 = vperm.xlu0 %1109, %v1104
        %v1111 = vpop.permute.xlu0 %1110
        %v1113 = vsub.f32 %v1099, %v1111
        %v1114 = vmul.f32 %v1113, 1.442695
        %v1115 = vpow.pop %v1114
        %v1116 = vld [vmem:[#allocation4] sm:$0xff]
        %v1117 = vmul.f32 %v1107, %v1116
        %v1118 = vsel %vm830, %v1115, 0.0
        %1119 = vadd.xlane.f32.xlu0 %v1118
        %v1120 = vpop.xlane.xlu0 %1119
        %v1121 = vadd.f32 %v1117, %v1120
        %vm1122 = vcmask 15368
        %1123 = vst.msk [vmem:[#allocation4] sm:$0xff] %vm1122, %v1121
        %v1124 = vld [vmem:[#allocation5] sm:$0xff]
        %1126 = vset.pattern.permute.xlu0 1
        %1127 = vperm.xlu0 %1126, %v1107
        %v1128 = vpop.permute.xlu0 %1127
        %v1130 = vmul.f32 %v1128, %v1124
        %1131 = vrot.lane.b32.xlu0 %v825, 88
        %v1132 = vpop.permute.xlu0 %1131
        %v1135 = vsel %vm830, %v1115, 0
        %1137 = vmatprep.subr.mxu0 0.0
        %1138 = vmatpush1.msra.mxu0 0.0
        %1139 = vmatprep.subr.mxu0 0.0
        %1140 = vmatpush1.msra.mxu0 0.0
        %1141 = vmatprep.subr.mxu0 0.0
        %1142 = vmatpush1.msra.mxu0 0.0
        %1143 = vmatprep.subr.mxu0 0.0
        %1144 = vmatpush1.msra.mxu0 0.0
        %1145 = vmatprep.subr.mxu0 0.0
        %1146 = vmatpush1.msra.mxu0 0.0
        %1147 = vmatprep.subr.mxu0 0.0
        %1148 = vmatpush1.msra.mxu0 0.0
        %1149 = vmatprep.subr.mxu0 0.0
        %1150 = vmatpush1.msra.mxu0 0.0
        %1151 = vmatprep.subr.mxu0 0.0
        %1152 = vmatpush1.msra.mxu0 0.0
        %1153 = vmatprep.subr.mxu0 0.0
        %1154 = vmatpush1.msra.mxu0 0.0
        %1155 = vmatprep.subr.mxu0 0.0
        %1156 = vmatpush1.msra.mxu0 0.0
        %1157 = vmatprep.subr.mxu0 0.0
        %1158 = vmatpush1.msra.mxu0 0.0
        %1159 = vmatprep.subr.mxu0 0.0
        %1160 = vmatpush1.msra.mxu0 0.0
        %1161 = vmatprep.subr.mxu0 0.0
        %1162 = vmatpush1.msra.mxu0 0.0
        %1163 = vmatprep.subr.mxu0 0.0
        %1164 = vmatpush1.msra.mxu0 0.0
        %1165 = vmatprep.subr.mxu0 0.0
        %1166 = vmatpush1.msra.mxu0 0.0
        %1167 = vmatprep.subr.mxu0 0.0
        %1168 = vmatpush1.msra.mxu0 %v1132
        %1169 = vmatprep.subr.mxu0 0.0
        %1170 = vmatpush2.msra.mxu0 0.0
        %1171 = vmatprep.subr.mxu0 0.0
        %1172 = vmatpush2.msra.mxu0 0.0
        %1173 = vmatprep.subr.mxu0 0.0
        %1174 = vmatpush2.msra.mxu0 0.0
        %1175 = vmatprep.subr.mxu0 0.0
        %1176 = vmatpush2.msra.mxu0 0.0
        %1177 = vmatprep.subr.mxu0 0.0
        %1178 = vmatpush2.msra.mxu0 0.0
        %1179 = vmatprep.subr.mxu0 0.0
        %1180 = vmatpush2.msra.mxu0 0.0
        %1181 = vmatprep.subr.mxu0 0.0
        %1182 = vmatpush2.msra.mxu0 0.0
        %1183 = vmatprep.subr.mxu0 0.0
        %1184 = vmatpush2.msra.mxu0 0.0
        %1185 = vmatprep.subr.mxu0 0.0
        %1186 = vmatpush2.msra.mxu0 0.0
        %1187 = vmatprep.subr.mxu0 0.0
        %1188 = vmatpush2.msra.mxu0 0.0
        %1189 = vmatprep.subr.mxu0 0.0
        %1190 = vmatpush2.msra.mxu0 0.0
        %1191 = vmatprep.subr.mxu0 0.0
        %1192 = vmatpush2.msra.mxu0 0.0
        %1193 = vmatprep.subr.mxu0 0.0
        %1194 = vmatpush2.msra.mxu0 0.0
        %1195 = vmatprep.subr.mxu0 0.0
        %1196 = vmatpush2.msra.mxu0 0.0
        %1197 = vmatprep.subr.mxu0 0.0
        %1198 = vmatpush2.msra.mxu0 0.0
        %1199 = vmatprep.subr.mxu0 0.0
        %1200 = vmatpush2.msra.mxu0 0.0
        %1201 = vmatprep.mubr.f32.mxu0 0.0
        %1202 = vmatmul.mubr.f32.gmra.mxu0 %v1135
        %v1203 = vpop.f32.mrf.mxu0
        %v1204 = vadd.f32 0.0, %v1203
        %v1205 = vpop.f32.mrf.mxu0
        %1206 = vdwg.mxu0
        %1208 = vrot.lane.b32.xlu0 %v1204, 8
        %v1209 = vpop.permute.xlu0 %1208
        %v1211 = vadd.f32 %v1130, %v1209
        %vm1212 = vcmask 130112
        %1213 = vst.msk [vmem:[#allocation5] sm:$0xff] %vm1212, %v1211
        %1214 = vst.msk [vmem:[#allocation3] sm:$0xff] %vm1122, %v1104
        %v1215 = vld [vmem:[#allocation2] sm:$0xff]
        %1217 = vrot.lane.b32.xlu0 %v1215, 112
        %v1218 = vpop.permute.xlu0 %1217
        %1219 = vrot.lane.b32.xlu0 %v825, 112
        %v1220 = vpop.permute.xlu0 %1219
        %v1221 = vsel %vm830, %v1218, 0
        %v1223 = vsel %vm830, %v1220, 0
        %1225 = vmatprep.subr.mxu0 0.0
        %1226 = vmatpush1.xpose.msra.mxu0 0.0
        %1227 = vmatprep.subr.mxu0 0.0
        %1228 = vmatpush1.xpose.msra.mxu0 0.0
        %1229 = vmatprep.subr.mxu0 0.0
        %1230 = vmatpush1.xpose.msra.mxu0 0.0
        %1231 = vmatprep.subr.mxu0 0.0
        %1232 = vmatpush1.xpose.msra.mxu0 0.0
        %1233 = vmatprep.subr.mxu0 0.0
        %1234 = vmatpush1.xpose.msra.mxu0 0.0
        %1235 = vmatprep.subr.mxu0 0.0
        %1236 = vmatpush1.xpose.msra.mxu0 0.0
        %1237 = vmatprep.subr.mxu0 0.0
        %1238 = vmatpush1.xpose.msra.mxu0 0.0
        %1239 = vmatprep.subr.mxu0 0.0
        %1240 = vmatpush1.xpose.msra.mxu0 0.0
        %1241 = vmatprep.subr.mxu0 0.0
        %1242 = vmatpush1.xpose.msra.mxu0 0.0
        %1243 = vmatprep.subr.mxu0 0.0
        %1244 = vmatpush1.xpose.msra.mxu0 0.0
        %1245 = vmatprep.subr.mxu0 0.0
        %1246 = vmatpush1.xpose.msra.mxu0 0.0
        %1247 = vmatprep.subr.mxu0 0.0
        %1248 = vmatpush1.xpose.msra.mxu0 0.0
        %1249 = vmatprep.subr.mxu0 0.0
        %1250 = vmatpush1.xpose.msra.mxu0 0.0
        %1251 = vmatprep.subr.mxu0 0.0
        %1252 = vmatpush1.xpose.msra.mxu0 0.0
        %1253 = vmatprep.subr.mxu0 0.0
        %1254 = vmatpush1.xpose.msra.mxu0 0.0
        %1255 = vmatprep.subr.mxu0 0.0
        %1256 = vmatpush1.xpose.msra.mxu0 %v1223
        %1257 = vmatprep.subr.mxu0 0.0
        %1258 = vmatpush2.xpose.msra.mxu0 0.0
        %1259 = vmatprep.subr.mxu0 0.0
        %1260 = vmatpush2.xpose.msra.mxu0 0.0
        %1261 = vmatprep.subr.mxu0 0.0
        %1262 = vmatpush2.xpose.msra.mxu0 0.0
        %1263 = vmatprep.subr.mxu0 0.0
        %1264 = vmatpush2.xpose.msra.mxu0 0.0
        %1265 = vmatprep.subr.mxu0 0.0
        %1266 = vmatpush2.xpose.msra.mxu0 0.0
        %1267 = vmatprep.subr.mxu0 0.0
        %1268 = vmatpush2.xpose.msra.mxu0 0.0
        %1269 = vmatprep.subr.mxu0 0.0
        %1270 = vmatpush2.xpose.msra.mxu0 0.0
        %1271 = vmatprep.subr.mxu0 0.0
        %1272 = vmatpush2.xpose.msra.mxu0 0.0
        %1273 = vmatprep.subr.mxu0 0.0
        %1274 = vmatpush2.xpose.msra.mxu0 0.0
        %1275 = vmatprep.subr.mxu0 0.0
        %1276 = vmatpush2.xpose.msra.mxu0 0.0
        %1277 = vmatprep.subr.mxu0 0.0
        %1278 = vmatpush2.xpose.msra.mxu0 0.0
        %1279 = vmatprep.subr.mxu0 0.0
        %1280 = vmatpush2.xpose.msra.mxu0 0.0
        %1281 = vmatprep.subr.mxu0 0.0
        %1282 = vmatpush2.xpose.msra.mxu0 0.0
        %1283 = vmatprep.subr.mxu0 0.0
        %1284 = vmatpush2.xpose.msra.mxu0 0.0
        %1285 = vmatprep.subr.mxu0 0.0
        %1286 = vmatpush2.xpose.msra.mxu0 0.0
        %1287 = vmatprep.subr.mxu0 0.0
        %1288 = vmatpush2.xpose.msra.mxu0 0.0
        %1289 = vmatprep.mubr.f32.mxu0 0.0
        %1290 = vmatmul.mubr.f32.gmra.mxu0 %v1221
        %v1291 = vpop.f32.mrf.mxu0
        %v1292 = vadd.f32 0.0, %v1291
        %v1293 = vpop.f32.mrf.mxu0
        %1294 = vdwg.mxu0
        %v1295 = vsel %vm907, -1e+30, %v1292
        %v1296 = vld [vmem:[#allocation3] sm:$0xff]
        %v1297 = vsel %vm830, %v1295, -inf
        %1298 = vmax.xlane.f32.xlu0 %v1297
        %v1299 = vpop.xlane.xlu0 %1298
        %v1300 = vmax.f32 %v1296, %v1299
        %v1301 = vsub.f32 %v1296, %v1300
        %v1302 = vmul.f32 %v1301, 1.442695
        %v1303 = vpow.pop %v1302
        %1305 = vset.pattern.permute.xlu0 2
        %1306 = vperm.xlu0 %1305, %v1300
        %v1307 = vpop.permute.xlu0 %1306
        %v1309 = vsub.f32 %v1295, %v1307
        %v1310 = vmul.f32 %v1309, 1.442695
        %v1311 = vpow.pop %v1310
        %v1312 = vld [vmem:[#allocation4] sm:$0xff]
        %v1313 = vmul.f32 %v1303, %v1312
        %v1314 = vsel %vm830, %v1311, 0.0
        %1315 = vadd.xlane.f32.xlu0 %v1314
        %v1316 = vpop.xlane.xlu0 %1315
        %v1317 = vadd.f32 %v1313, %v1316
        %vm1318 = vcmask 23568
        %1319 = vst.msk [vmem:[#allocation4] sm:$0xff] %vm1318, %v1317
        %v1320 = vld [vmem:[#allocation5] sm:$0xff]
        %1322 = vset.pattern.permute.xlu0 2
        %1323 = vperm.xlu0 %1322, %v1303
        %v1324 = vpop.permute.xlu0 %1323
        %v1326 = vmul.f32 %v1324, %v1320
        %1327 = vrot.lane.b32.xlu0 %v825, 80
        %v1328 = vpop.permute.xlu0 %1327
        %v1331 = vsel %vm830, %v1311, 0
        %1333 = vmatprep.subr.mxu0 0.0
        %1334 = vmatpush1.msra.mxu0 0.0
        %1335 = vmatprep.subr.mxu0 0.0
        %1336 = vmatpush1.msra.mxu0 0.0
        %1337 = vmatprep.subr.mxu0 0.0
        %1338 = vmatpush1.msra.mxu0 0.0
        %1339 = vmatprep.subr.mxu0 0.0
        %1340 = vmatpush1.msra.mxu0 0.0
        %1341 = vmatprep.subr.mxu0 0.0
        %1342 = vmatpush1.msra.mxu0 0.0
        %1343 = vmatprep.subr.mxu0 0.0
        %1344 = vmatpush1.msra.mxu0 0.0
        %1345 = vmatprep.subr.mxu0 0.0
        %1346 = vmatpush1.msra.mxu0 0.0
        %1347 = vmatprep.subr.mxu0 0.0
        %1348 = vmatpush1.msra.mxu0 0.0
        %1349 = vmatprep.subr.mxu0 0.0
        %1350 = vmatpush1.msra.mxu0 0.0
        %1351 = vmatprep.subr.mxu0 0.0
        %1352 = vmatpush1.msra.mxu0 0.0
        %1353 = vmatprep.subr.mxu0 0.0
        %1354 = vmatpush1.msra.mxu0 0.0
        %1355 = vmatprep.subr.mxu0 0.0
        %1356 = vmatpush1.msra.mxu0 0.0
        %1357 = vmatprep.subr.mxu0 0.0
        %1358 = vmatpush1.msra.mxu0 0.0
        %1359 = vmatprep.subr.mxu0 0.0
        %1360 = vmatpush1.msra.mxu0 0.0
        %1361 = vmatprep.subr.mxu0 0.0
        %1362 = vmatpush1.msra.mxu0 0.0
        %1363 = vmatprep.subr.mxu0 0.0
        %1364 = vmatpush1.msra.mxu0 %v1328
        %1365 = vmatprep.subr.mxu0 0.0
        %1366 = vmatpush2.msra.mxu0 0.0
        %1367 = vmatprep.subr.mxu0 0.0
        %1368 = vmatpush2.msra.mxu0 0.0
        %1369 = vmatprep.subr.mxu0 0.0
        %1370 = vmatpush2.msra.mxu0 0.0
        %1371 = vmatprep.subr.mxu0 0.0
        %1372 = vmatpush2.msra.mxu0 0.0
        %1373 = vmatprep.subr.mxu0 0.0
        %1374 = vmatpush2.msra.mxu0 0.0
        %1375 = vmatprep.subr.mxu0 0.0
        %1376 = vmatpush2.msra.mxu0 0.0
        %1377 = vmatprep.subr.mxu0 0.0
        %1378 = vmatpush2.msra.mxu0 0.0
        %1379 = vmatprep.subr.mxu0 0.0
        %1380 = vmatpush2.msra.mxu0 0.0
        %1381 = vmatprep.subr.mxu0 0.0
        %1382 = vmatpush2.msra.mxu0 0.0
        %1383 = vmatprep.subr.mxu0 0.0
        %1384 = vmatpush2.msra.mxu0 0.0
        %1385 = vmatprep.subr.mxu0 0.0
        %1386 = vmatpush2.msra.mxu0 0.0
        %1387 = vmatprep.subr.mxu0 0.0
        %1388 = vmatpush2.msra.mxu0 0.0
        %1389 = vmatprep.subr.mxu0 0.0
        %1390 = vmatpush2.msra.mxu0 0.0
        %1391 = vmatprep.subr.mxu0 0.0
        %1392 = vmatpush2.msra.mxu0 0.0
        %1393 = vmatprep.subr.mxu0 0.0
        %1394 = vmatpush2.msra.mxu0 0.0
        %1395 = vmatprep.subr.mxu0 0.0
        %1396 = vmatpush2.msra.mxu0 0.0
        %1397 = vmatprep.mubr.f32.mxu0 0.0
        %1398 = vmatmul.mubr.f32.gmra.mxu0 %v1331
        %v1399 = vpop.f32.mrf.mxu0
        %v1400 = vadd.f32 0.0, %v1399
        %v1401 = vpop.f32.mrf.mxu0
        %1402 = vdwg.mxu0
        %1404 = vrot.lane.b32.xlu0 %v1400, 16
        %v1405 = vpop.permute.xlu0 %1404
        %v1407 = vadd.f32 %v1326, %v1405
        %vm1408 = vcmask 195712
        %1409 = vst.msk [vmem:[#allocation5] sm:$0xff] %vm1408, %v1407
        %1410 = vst.msk [vmem:[#allocation3] sm:$0xff] %vm1318, %v1300
        %v1411 = vld [vmem:[#allocation2] sm:$0xff]
        %1413 = vrot.lane.b32.xlu0 %v1411, 104
        %v1414 = vpop.permute.xlu0 %1413
        %1415 = vrot.lane.b32.xlu0 %v825, 104
        %v1416 = vpop.permute.xlu0 %1415
        %v1417 = vsel %vm830, %v1414, 0
        %v1419 = vsel %vm830, %v1416, 0
        %1421 = vmatprep.subr.mxu0 0.0
        %1422 = vmatpush1.xpose.msra.mxu0 0.0
        %1423 = vmatprep.subr.mxu0 0.0
        %1424 = vmatpush1.xpose.msra.mxu0 0.0
        %1425 = vmatprep.subr.mxu0 0.0
        %1426 = vmatpush1.xpose.msra.mxu0 0.0
        %1427 = vmatprep.subr.mxu0 0.0
        %1428 = vmatpush1.xpose.msra.mxu0 0.0
        %1429 = vmatprep.subr.mxu0 0.0
        %1430 = vmatpush1.xpose.msra.mxu0 0.0
        %1431 = vmatprep.subr.mxu0 0.0
        %1432 = vmatpush1.xpose.msra.mxu0 0.0
        %1433 = vmatprep.subr.mxu0 0.0
        %1434 = vmatpush1.xpose.msra.mxu0 0.0
        %1435 = vmatprep.subr.mxu0 0.0
        %1436 = vmatpush1.xpose.msra.mxu0 0.0
        %1437 = vmatprep.subr.mxu0 0.0
        %1438 = vmatpush1.xpose.msra.mxu0 0.0
        %1439 = vmatprep.subr.mxu0 0.0
        %1440 = vmatpush1.xpose.msra.mxu0 0.0
        %1441 = vmatprep.subr.mxu0 0.0
        %1442 = vmatpush1.xpose.msra.mxu0 0.0
        %1443 = vmatprep.subr.mxu0 0.0
        %1444 = vmatpush1.xpose.msra.mxu0 0.0
        %1445 = vmatprep.subr.mxu0 0.0
        %1446 = vmatpush1.xpose.msra.mxu0 0.0
        %1447 = vmatprep.subr.mxu0 0.0
        %1448 = vmatpush1.xpose.msra.mxu0 0.0
        %1449 = vmatprep.subr.mxu0 0.0
        %1450 = vmatpush1.xpose.msra.mxu0 0.0
        %1451 = vmatprep.subr.mxu0 0.0
        %1452 = vmatpush1.xpose.msra.mxu0 %v1419
        %1453 = vmatprep.subr.mxu0 0.0
        %1454 = vmatpush2.xpose.msra.mxu0 0.0
        %1455 = vmatprep.subr.mxu0 0.0
        %1456 = vmatpush2.xpose.msra.mxu0 0.0
        %1457 = vmatprep.subr.mxu0 0.0
        %1458 = vmatpush2.xpose.msra.mxu0 0.0
        %1459 = vmatprep.subr.mxu0 0.0
        %1460 = vmatpush2.xpose.msra.mxu0 0.0
        %1461 = vmatprep.subr.mxu0 0.0
        %1462 = vmatpush2.xpose.msra.mxu0 0.0
        %1463 = vmatprep.subr.mxu0 0.0
        %1464 = vmatpush2.xpose.msra.mxu0 0.0
        %1465 = vmatprep.subr.mxu0 0.0
        %1466 = vmatpush2.xpose.msra.mxu0 0.0
        %1467 = vmatprep.subr.mxu0 0.0
        %1468 = vmatpush2.xpose.msra.mxu0 0.0
        %1469 = vmatprep.subr.mxu0 0.0
        %1470 = vmatpush2.xpose.msra.mxu0 0.0
        %1471 = vmatprep.subr.mxu0 0.0
        %1472 = vmatpush2.xpose.msra.mxu0 0.0
        %1473 = vmatprep.subr.mxu0 0.0
        %1474 = vmatpush2.xpose.msra.mxu0 0.0
        %1475 = vmatprep.subr.mxu0 0.0
        %1476 = vmatpush2.xpose.msra.mxu0 0.0
        %1477 = vmatprep.subr.mxu0 0.0
        %1478 = vmatpush2.xpose.msra.mxu0 0.0
        %1479 = vmatprep.subr.mxu0 0.0
        %1480 = vmatpush2.xpose.msra.mxu0 0.0
        %1481 = vmatprep.subr.mxu0 0.0
        %1482 = vmatpush2.xpose.msra.mxu0 0.0
        %1483 = vmatprep.subr.mxu0 0.0
        %1484 = vmatpush2.xpose.msra.mxu0 0.0
        %1485 = vmatprep.mubr.f32.mxu0 0.0
        %1486 = vmatmul.mubr.f32.gmra.mxu0 %v1417
        %v1487 = vpop.f32.mrf.mxu0
        %v1488 = vadd.f32 0.0, %v1487
        %v1489 = vpop.f32.mrf.mxu0
        %1490 = vdwg.mxu0
        %v1491 = vsel %vm907, -1e+30, %v1488
        %v1492 = vld [vmem:[#allocation3] sm:$0xff]
        %v1493 = vsel %vm830, %v1491, -inf
        %1494 = vmax.xlane.f32.xlu0 %v1493
        %v1495 = vpop.xlane.xlu0 %1494
        %v1496 = vmax.f32 %v1492, %v1495
        %v1497 = vsub.f32 %v1492, %v1496
        %v1498 = vmul.f32 %v1497, 1.442695
        %v1499 = vpow.pop %v1498
        %1501 = vset.pattern.permute.xlu0 3
        %1502 = vperm.xlu0 %1501, %v1496
        %v1503 = vpop.permute.xlu0 %1502
        %v1505 = vsub.f32 %v1491, %v1503
        %v1506 = vmul.f32 %v1505, 1.442695
        %v1507 = vpow.pop %v1506
        %v1508 = vld [vmem:[#allocation4] sm:$0xff]
        %v1509 = vmul.f32 %v1499, %v1508
        %v1510 = vsel %vm830, %v1507, 0.0
        %1511 = vadd.xlane.f32.xlu0 %v1510
        %v1512 = vpop.xlane.xlu0 %1511
        %v1513 = vadd.f32 %v1509, %v1512
        %vm1514 = vcmask 31768
        %1515 = vst.msk [vmem:[#allocation4] sm:$0xff] %vm1514, %v1513
        %v1516 = vld [vmem:[#allocation5] sm:$0xff]
        %1518 = vset.pattern.permute.xlu0 3
        %1519 = vperm.xlu0 %1518, %v1499
        %v1520 = vpop.permute.xlu0 %1519
        %v1522 = vmul.f32 %v1520, %v1516
        %1523 = vrot.lane.b32.xlu0 %v825, 72
        %v1524 = vpop.permute.xlu0 %1523
        %v1527 = vsel %vm830, %v1507, 0
        %1529 = vmatprep.subr.mxu0 0.0
        %1530 = vmatpush1.msra.mxu0 0.0
        %1531 = vmatprep.subr.mxu0 0.0
        %1532 = vmatpush1.msra.mxu0 0.0
        %1533 = vmatprep.subr.mxu0 0.0
        %1534 = vmatpush1.msra.mxu0 0.0
        %1535 = vmatprep.subr.mxu0 0.0
        %1536 = vmatpush1.msra.mxu0 0.0
        %1537 = vmatprep.subr.mxu0 0.0
        %1538 = vmatpush1.msra.mxu0 0.0
        %1539 = vmatprep.subr.mxu0 0.0
        %1540 = vmatpush1.msra.mxu0 0.0
        %1541 = vmatprep.subr.mxu0 0.0
        %1542 = vmatpush1.msra.mxu0 0.0
        %1543 = vmatprep.subr.mxu0 0.0
        %1544 = vmatpush1.msra.mxu0 0.0
        %1545 = vmatprep.subr.mxu0 0.0
        %1546 = vmatpush1.msra.mxu0 0.0
        %1547 = vmatprep.subr.mxu0 0.0
        %1548 = vmatpush1.msra.mxu0 0.0
        %1549 = vmatprep.subr.mxu0 0.0
        %1550 = vmatpush1.msra.mxu0 0.0
        %1551 = vmatprep.subr.mxu0 0.0
        %1552 = vmatpush1.msra.mxu0 0.0
        %1553 = vmatprep.subr.mxu0 0.0
        %1554 = vmatpush1.msra.mxu0 0.0
        %1555 = vmatprep.subr.mxu0 0.0
        %1556 = vmatpush1.msra.mxu0 0.0
        %1557 = vmatprep.subr.mxu0 0.0
        %1558 = vmatpush1.msra.mxu0 0.0
        %1559 = vmatprep.subr.mxu0 0.0
        %1560 = vmatpush1.msra.mxu0 %v1524
        %1561 = vmatprep.subr.mxu0 0.0
        %1562 = vmatpush2.msra.mxu0 0.0
        %1563 = vmatprep.subr.mxu0 0.0
        %1564 = vmatpush2.msra.mxu0 0.0
        %1565 = vmatprep.subr.mxu0 0.0
        %1566 = vmatpush2.msra.mxu0 0.0
        %1567 = vmatprep.subr.mxu0 0.0
        %1568 = vmatpush2.msra.mxu0 0.0
        %1569 = vmatprep.subr.mxu0 0.0
        %1570 = vmatpush2.msra.mxu0 0.0
        %1571 = vmatprep.subr.mxu0 0.0
        %1572 = vmatpush2.msra.mxu0 0.0
        %1573 = vmatprep.subr.mxu0 0.0
        %1574 = vmatpush2.msra.mxu0 0.0
        %1575 = vmatprep.subr.mxu0 0.0
        %1576 = vmatpush2.msra.mxu0 0.0
        %1577 = vmatprep.subr.mxu0 0.0
        %1578 = vmatpush2.msra.mxu0 0.0
        %1579 = vmatprep.subr.mxu0 0.0
        %1580 = vmatpush2.msra.mxu0 0.0
        %1581 = vmatprep.subr.mxu0 0.0
        %1582 = vmatpush2.msra.mxu0 0.0
        %1583 = vmatprep.subr.mxu0 0.0
        %1584 = vmatpush2.msra.mxu0 0.0
        %1585 = vmatprep.subr.mxu0 0.0
        %1586 = vmatpush2.msra.mxu0 0.0
        %1587 = vmatprep.subr.mxu0 0.0
        %1588 = vmatpush2.msra.mxu0 0.0
        %1589 = vmatprep.subr.mxu0 0.0
        %1590 = vmatpush2.msra.mxu0 0.0
        %1591 = vmatprep.subr.mxu0 0.0
        %1592 = vmatpush2.msra.mxu0 0.0
        %1593 = vmatprep.mubr.f32.mxu0 0.0
        %1594 = vmatmul.mubr.f32.gmra.mxu0 %v1527
        %v1595 = vpop.f32.mrf.mxu0
        %v1596 = vadd.f32 0.0, %v1595
        %v1597 = vpop.f32.mrf.mxu0
        %1598 = vdwg.mxu0
        %1600 = vrot.lane.b32.xlu0 %v1596, 24
        %v1601 = vpop.permute.xlu0 %1600
        %v1603 = vadd.f32 %v1522, %v1601
        %vm1604 = vcmask 261312
        %1605 = vst.msk [vmem:[#allocation5] sm:$0xff] %vm1604, %v1603
        %1606 = vst.msk [vmem:[#allocation3] sm:$0xff] %vm1514, %v1496
        %p1607 = pnand %p715, %p597
        %p1608 = pneg %p1607
        // Predicated region
        $region89: #{tpu_custom_call.1} parent=55 // pred_check
          _
        $region90: #{tpu_custom_call.1} parent=55 // pred_check_branch
          %1610 = sbr.rel (%p1607) target = $region92
        $region91: #{tpu_custom_call.1} parent=55 // pred_region
          %v1611 = vld [vmem:[%s496] sm:$0xff]
          %v1612 = vsel %vm717, %v1611, 0.0
          %1613 = vadd.xlane.f32.xlu0 %v1612
          %v1614 = vpop.xlane.xlu0 %1613
          %v1615 = vmul.f32 %v1614, %v721
          %v1616 = vsub.f32 %v1611, %v1615
          %v1617 = vmul.f32 %v1616, %v1616
          %v1618 = vsel %vm717, %v1617, 0.0
          %1619 = vadd.xlane.f32.xlu0 %v1618
          %v1620 = vpop.xlane.xlu0 %1619
          %v1621 = vmul.f32 %v1620, %v721
          %v1622 = vadd.f32 %v1621, 1e-06
          %v1623 = vrsqrt.pop %v1622
          %v1624 = vmul.f32 %v1616, %v1623
          %v1625 = vmul.f32 %v1624, %v736
          %v1626 = vadd.f32 %v1625, %v743
          %1627 = vst.msk [vmem:[%s591] sm:$0xff] %vm717, %v1626
          %v1628 = vld [vmem:[#allocation4] sm:$0xff]
          %v1629 = vrcp.pop %v1628
          %v1630 = vld [vmem:[#allocation5] sm:$0xff]
          %1632 = vset.pattern.permute.xlu0 0
          %1633 = vperm.xlu0 %1632, %v1629
          %v1634 = vpop.permute.xlu0 %1633
          %v1636 = vmul.f32 %v1630, %v1634
          %1637 = vst.msk [vmem:[#allocation5] sm:$0xff] %vm830, %v1636
          %v1638 = vld [vmem:[#allocation5] sm:$0xff]
          %1639 = vset.pattern.permute.xlu0 1
          %1640 = vperm.xlu0 %1639, %v1629
          %v1641 = vpop.permute.xlu0 %1640
          %v1643 = vmul.f32 %v1638, %v1641
          %1644 = vst.msk [vmem:[#allocation5] sm:$0xff] %vm1212, %v1643
          %v1645 = vld [vmem:[#allocation5] sm:$0xff]
          %1646 = vset.pattern.permute.xlu0 2
          %1647 = vperm.xlu0 %1646, %v1629
          %v1648 = vpop.permute.xlu0 %1647
          %v1650 = vmul.f32 %v1645, %v1648
          %1651 = vst.msk [vmem:[#allocation5] sm:$0xff] %vm1408, %v1650
          %v1652 = vld [vmem:[#allocation5] sm:$0xff]
          %1653 = vset.pattern.permute.xlu0 3
          %1654 = vperm.xlu0 %1653, %v1629
          %v1655 = vpop.permute.xlu0 %1654
          %v1657 = vmul.f32 %v1652, %v1655
          %1658 = vst.msk [vmem:[#allocation5] sm:$0xff] %vm1604, %v1657
          %v1659 = vld [vmem:[#allocation5] sm:$0xff]
          %v1660 = vld [vmem:[#allocation17] sm:$0xff]
          %v1661 = vld [vmem:[#allocation17 + $0x8] sm:$0xff]
          %v1662 = vld [vmem:[#allocation17 + $0x10] sm:$0xff]
          %v1663 = vld [vmem:[#allocation17 + $0x18] sm:$0xff]
          %v1665 = vsel %vm717, %v1659, 0
          %1667 = vmatprep.subr.mxu0 0.0
          %1668 = vmatpush1.msra.mxu0 0.0
          %1669 = vmatprep.subr.mxu0 0.0
          %1670 = vmatpush1.msra.mxu0 0.0
          %1671 = vmatprep.subr.mxu0 0.0
          %1672 = vmatpush1.msra.mxu0 0.0
          %1673 = vmatprep.subr.mxu0 0.0
          %1674 = vmatpush1.msra.mxu0 0.0
          %1675 = vmatprep.subr.mxu0 0.0
          %1676 = vmatpush1.msra.mxu0 0.0
          %1677 = vmatprep.subr.mxu0 0.0
          %1678 = vmatpush1.msra.mxu0 0.0
          %1679 = vmatprep.subr.mxu0 0.0
          %1680 = vmatpush1.msra.mxu0 0.0
          %1681 = vmatprep.subr.mxu0 0.0
          %1682 = vmatpush1.msra.mxu0 0.0
          %1683 = vmatprep.subr.mxu0 0.0
          %1684 = vmatpush1.msra.mxu0 0.0
          %1685 = vmatprep.subr.mxu0 0.0
          %1686 = vmatpush1.msra.mxu0 0.0
          %1687 = vmatprep.subr.mxu0 0.0
          %1688 = vmatpush1.msra.mxu0 0.0
          %1689 = vmatprep.subr.mxu0 0.0
          %1690 = vmatpush1.msra.mxu0 0.0
          %1691 = vmatprep.subr.mxu0 0.0
          %1692 = vmatpush1.msra.mxu0 %v1663
          %1693 = vmatprep.subr.mxu0 0.0
          %1694 = vmatpush1.msra.mxu0 %v1662
          %1695 = vmatprep.subr.mxu0 0.0
          %1696 = vmatpush1.msra.mxu0 %v1661
          %1697 = vmatprep.subr.mxu0 0.0
          %1698 = vmatpush1.msra.mxu0 %v1660
          %1699 = vmatprep.subr.mxu0 0.0
          %1700 = vmatpush2.msra.mxu0 0.0
          %1701 = vmatprep.subr.mxu0 0.0
          %1702 = vmatpush2.msra.mxu0 0.0
          %1703 = vmatprep.subr.mxu0 0.0
          %1704 = vmatpush2.msra.mxu0 0.0
          %1705 = vmatprep.subr.mxu0 0.0
          %1706 = vmatpush2.msra.mxu0 0.0
          %1707 = vmatprep.subr.mxu0 0.0
          %1708 = vmatpush2.msra.mxu0 0.0
          %1709 = vmatprep.subr.mxu0 0.0
          %1710 = vmatpush2.msra.mxu0 0.0
          %1711 = vmatprep.subr.mxu0 0.0
          %1712 = vmatpush2.msra.mxu0 0.0
          %1713 = vmatprep.subr.mxu0 0.0
          %1714 = vmatpush2.msra.mxu0 0.0
          %1715 = vmatprep.subr.mxu0 0.0
          %1716 = vmatpush2.msra.mxu0 0.0
          %1717 = vmatprep.subr.mxu0 0.0
          %1718 = vmatpush2.msra.mxu0 0.0
          %1719 = vmatprep.subr.mxu0 0.0
          %1720 = vmatpush2.msra.mxu0 0.0
          %1721 = vmatprep.subr.mxu0 0.0
          %1722 = vmatpush2.msra.mxu0 0.0
          %1723 = vmatprep.subr.mxu0 0.0
          %1724 = vmatpush2.msra.mxu0 0.0
          %1725 = vmatprep.subr.mxu0 0.0
          %1726 = vmatpush2.msra.mxu0 0.0
          %1727 = vmatprep.subr.mxu0 0.0
          %1728 = vmatpush2.msra.mxu0 0.0
          %1729 = vmatprep.subr.mxu0 0.0
          %1730 = vmatpush2.msra.mxu0 0.0
          %1731 = vmatprep.mubr.f32.mxu0 0.0
          %1732 = vmatmul.mubr.f32.gmra.mxu0 %v1665
          %v1733 = vpop.f32.mrf.mxu0
          %v1734 = vadd.f32 0.0, %v1733
          %v1735 = vpop.f32.mrf.mxu0
          %1736 = vdwg.mxu0
          %1737 = vst.msk [vmem:[%s584] sm:$0xff] %vm717, %v1734
        $region92: #{tpu_custom_call.1} parent=55 // pred_fallthru
          _
        %s1738 = sand.u32 %s299, 1
        %s1739 = scalar_lea.sflag [#allocation8], %s1738
        %s1740 = sand.u32 %s299, 1
        %s1741 = smul.addr %s1740, 8
        %s1742 = scalar_lea.vmem [#allocation18], %s1741
        %s1743 = sand.u32 %s327, 1
        %s1744 = scalar_lea.sflag [#allocation20], %s1743
        %s1745 = sand.u32 %s327, 1
        %s1746 = smul.addr %s1745, 8
        %s1747 = scalar_lea.vmem [#allocation19], %s1746
        // Predicated region
        $region93: #{tpu_custom_call.1} parent=55 // pred_check
          %p1748 = pneg %p309
        $region94: #{tpu_custom_call.1} parent=55 // pred_check_branch
          %1750 = sbr.rel (%p1748) target = $region96
        $region95: #{tpu_custom_call.1} parent=55 // pred_region
          %s1752 = ssub.s32 128, 128
          %1753 = vsyncadd %s1739, %s1752
          %s1754 = sadd.s32 %s45, %s44
          %s1755 = smul.addr %s1754, 128
          %s1756 = scalar_lea.hbm %s9, %s1755
          %s1758 = sshll.u32 %s1742, 4
          %s1759 = int_to_ptr.vmem [resolvable:$true] %s1758
          %1761 = dma.vmem_to_hbm [thread:$0]  %s1759, 128, %s1756, %s1739
        $region96: #{tpu_custom_call.1} parent=55 // pred_fallthru
          _
        // Predicated region
        $region97: #{tpu_custom_call.1} parent=55 // pred_check
          %p1762 = pneg %p337
        $region98: #{tpu_custom_call.1} parent=55 // pred_check_branch
          %1764 = sbr.rel (%p1762) target = $region100
        $region99: #{tpu_custom_call.1} parent=55 // pred_region
          %s1766 = ssub.s32 128, 128
          %1767 = vsyncadd %s1744, %s1766
          %s1768 = sadd.s32 %s45, %s44
          %s1769 = smul.addr %s1768, 128
          %s1770 = scalar_lea.hbm %s10, %s1769
          %s1772 = sshll.u32 %s1747, 4
          %s1773 = int_to_ptr.vmem [resolvable:$true] %s1772
          %1775 = dma.vmem_to_hbm [thread:$0]  %s1773, 128, %s1770, %s1744
        $region100: #{tpu_custom_call.1} parent=55 // pred_fallthru
          _
      $region56: #{tpu_custom_call.1} parent=5 // pred_fallthru
        _
      %p1776 = scmp.le.s32.totalorder 2, %s33
      // Predicated region
      $region101: #{tpu_custom_call.1} parent=5 // pred_check
        %p1777 = pneg %p1776
      $region102: #{tpu_custom_call.1} parent=5 // pred_check_branch
        %1779 = sbr.rel (%p1777) target = $region104
      $region103: #{tpu_custom_call.1} parent=5 // pred_region
        %s1780 = ssub.s32 %s33, 2
        // Predicated region
        $region105: #{tpu_custom_call.1} parent=103 // pred_check
          %p1781 = pneg %p315
        $region106: #{tpu_custom_call.1} parent=103 // pred_check_branch
          %1783 = sbr.rel (%p1781) target = $region108
        $region107: #{tpu_custom_call.1} parent=103 // pred_region
          %s1784 = sand.u32 %s300, 1
          %s1785 = scalar_lea.sflag [#allocation8], %s1784
          %s1786 = sand.u32 %s300, 1
          %s1787 = smul.addr %s1786, 8
          %s1788 = scalar_lea.vmem [#allocation18], %s1787
          %1789 = dma.done %s1785, 128
        $region108: #{tpu_custom_call.1} parent=103 // pred_fallthru
          _
        // Predicated region
        $region109: #{tpu_custom_call.1} parent=103 // pred_check
          %p1790 = pneg %p343
        $region110: #{tpu_custom_call.1} parent=103 // pred_check_branch
          %1792 = sbr.rel (%p1790) target = $region112
        $region111: #{tpu_custom_call.1} parent=103 // pred_region
          %s1793 = sand.u32 %s328, 1
          %s1794 = scalar_lea.sflag [#allocation20], %s1793
          %s1795 = sand.u32 %s328, 1
          %s1796 = smul.addr %s1795, 8
          %s1797 = scalar_lea.vmem [#allocation19], %s1796
          %1798 = dma.done %s1794, 128
        $region112: #{tpu_custom_call.1} parent=103 // pred_fallthru
          _
      $region104: #{tpu_custom_call.1} parent=5 // pred_fallthru
        _
    $region6: #{tpu_custom_call.1} parent=1 // loop_footer
      %s37 = sadd.s32 1, %s33
    $region7: #{tpu_custom_call.1} parent=1 // loop_footer_branch
      %32 = sbr.rel target = $region3
    $region8: #{tpu_custom_call.1} parent=1 // loop_exit
      _
    %1799 = vsyncpa [#allocation7], 1
    %s1800 = scalar_lea.sflag [#allocation7], 1
    %1801 = vsyncpa %s1800, 1
    %1802 = vsyncpa [#allocation10], 1
    %s1803 = scalar_lea.sflag [#allocation10], 1
    %1804 = vsyncpa %s1803, 1
    %1805 = vsyncpa [#allocation13], 1
    %s1806 = scalar_lea.sflag [#allocation13], 1
    %1807 = vsyncpa %s1806, 1
    %1808 = vsyncpa [#allocation16], 1
    %1809 = vsyncpa [#allocation8], 1
    %s1810 = scalar_lea.sflag [#allocation8], 1
    %1811 = vsyncpa %s1810, 1
    %1812 = vsyncpa [#allocation20], 1
    %s1813 = scalar_lea.sflag [#allocation20], 1
    %1814 = vsyncpa %s1813, 1

</llo_original>
